<compile_context>
chip_gen: v6e
topology: v6e:2x2x1
jax: 0.10.0
libtpu: 0.0.40
codegen_flags: <defaults>
</compile_context>

<pallas_src>
import functools
import math

import numpy as np
import jax
import jax.numpy as jnp
from jax.experimental import pallas as pl
from jax.experimental.pallas import tpu as pltpu

# ----------------------------- model configuration ---------------------------
VOCAB = 128
EMBED_DIM = 32       # MambaPlusPlusML requires embed_dim == hidden_dim to stack layers
HIDDEN_DIM = 32      # == the layer's head_dim
NUM_HEADS = 4
NUM_LAYERS = 2
BATCH = 2
SEQ = 8
LN_EPS = 1e-5        # PyTorch nn.LayerNorm default


def _pad128(n):
    return ((n + 127) // 128) * 128


# --------------------------- in-kernel helpers -------------------------------
def _erf(x):
    # Abramowitz & Stegun 7.1.26 rational approximation (max abs err ~1.5e-7).
    a1, a2, a3, a4, a5 = (0.254829592, -0.284496736, 1.421413741,
                          -1.453152027, 1.061405429)
    p = 0.3275911
    s = jnp.where(x >= 0.0, 1.0, -1.0)
    ax = jnp.abs(x)
    t = 1.0 / (1.0 + p * ax)
    poly = ((((a5 * t + a4) * t + a3) * t + a2) * t + a1) * t
    return s * (1.0 - poly * jnp.exp(-ax * ax))


def _gelu_exact(x):
    return 0.5 * x * (1.0 + _erf(x * (1.0 / math.sqrt(2.0))))


# ------------------------------ layer kernel ----------------------------------
def mamba_layer_kernel(x_ref, wpre_ref, wbig_ref, wsmall_ref, out_ref,
                       *, B, E, D, H):
    """One MambaPlusPlus_layer. Rows are timesteps, lanes are batch-blocked."""
    L = x_ref.shape[0]
    F = 4 * D
    BE, BD, BHD, BF = B * E, B * D, B * H * D, B * F
    PD = _pad128(BD)

    x = x_ref[...]                                            # (L, B*E)

    # ---- parameter views (static, lane/sublane-aligned slices) --------------
    w_pre = wpre_ref[0:BE, :]
    b_pre = wpre_ref[BE + 0:BE + 1, :]
    g_b = wpre_ref[BE + 1:BE + 2, 0:BHD]          # per-head LN gamma * hw/H (folded)
    bt_b = wpre_ref[BE + 2:BE + 3, 0:BHD]         # per-head LN beta  * hw/H (folded)
    ng_b = wpre_ref[BE + 3:BE + 4, 0:BD]          # output LN gamma
    nb_b = wpre_ref[BE + 4:BE + 5, 0:BD]          # output LN beta
    b_t1 = wpre_ref[BE + 5:BE + 6, 0:BF + PD]     # [b1 | b2@Wp + bp]

    # ---- pre-scan: ONE fused lane-dense matmul over all L rows ---------------
    pre = jnp.dot(x, w_pre, preferred_element_type=jnp.float32) + b_pre
    a_all = jnp.tanh(pre[:, 0:BHD])               # per-head gates      (L, B*HD)
    b_in = pre[:, BHD:2 * BHD]                    # per-head inputs
    oc = pre[:, 2 * BHD:3 * BHD]                  # bc_i + D(x), tiled per head
    ocm = pre[:, 3 * BHD:4 * BHD]                 # per-head mean of (bc_i + D(x))
    c0 = 4 * BHD
    dxd = pre[:, c0:c0 + BD]                      # D(x) / H
    dxdm = pre[:, c0 + PD:c0 + PD + BD]           # mean_D(D(x)) / H

    # ---- recurrence: registers only, (L, B*HD) lane-dense, no VMEM scratch ---
    h = jnp.zeros((1, BHD), jnp.float32)
    hs = []
    for t in range(L):                            # statically unrolled; serial by nature
        h = a_all[t:t + 1, :] * h + b_in[t:t + 1, :]
        hs.append(h)
    hseq = jnp.concatenate(hs, axis=0)            # (L, B*HD)

    # ---- post-scan: fused [C(h) | mean_head(C(h))] matmul + per-head LN ------
    pc = jnp.dot(hseq, wbig_ref[0:BHD, 0:2 * BHD],
                 preferred_element_type=jnp.float32)
    o_pre = pc[:, 0:BHD] + oc
    mu = pc[:, BHD:2 * BHD] + ocm
    xc = o_pre - mu
    var = jnp.dot(xc * xc, wbig_ref[0:BHD, 2 * BHD:3 * BHD],
                  preferred_element_type=jnp.float32)
    lno = xc * jax.lax.rsqrt(var + LN_EPS) * g_b + bt_b       # hw/H folded in

    # ---- head mixing (+ fused row-mean of z for the output LayerNorm) --------
    zz = jnp.dot(lno, wbig_ref[0:BHD, 3 * BHD:3 * BHD + 2 * PD],
                 preferred_element_type=jnp.float32)
    z = zz[:, 0:BD] + dxd                         # (D(x) + sum_i hw_i*LN_i)/H
    zmu = zz[:, PD:PD + BD] + dxdm                # mean_D(z)
    zc = z - zmu
    zvar = jnp.dot(zc * zc, wsmall_ref[0:BD, BF + PD:BF + PD + BD],
                   preferred_element_type=jnp.float32)
    u = z + zc * jax.lax.rsqrt(zvar + LN_EPS) * ng_b + nb_b

    # ---- tail: u @ [W1 | Wp] in one matmul; proj folded into ffn2 host-side --
    t1 = jnp.dot(u, wsmall_ref[0:BD, 0:BF + PD],
                 preferred_element_type=jnp.float32) + b_t1
    f = _gelu_exact(t1[:, 0:BF])
    u_proj = t1[:, BF:BF + BD]                    # u@Wp + (b2@Wp + bp)
    c1 = 3 * BHD + 2 * PD
    out_ref[...] = u_proj + jnp.dot(f, wbig_ref[0:BF, c1:c1 + BD],
                                    preferred_element_type=jnp.float32)


# ------------------------------ head kernel -----------------------------------
def head_kernel(x_ref, whead_ref, out_ref, *, B, E, V):
    """Final model LayerNorm + output_fc, lane-dense (B*V = 256 lane) output."""
    BE, BV = B * E, B * V
    PE = _pad128(BE)
    x = x_ref[...]                                            # (L, B*E)
    m_e = whead_ref[0:BE, 0:BE]                               # per-batch mean over E
    w_o = whead_ref[0:BE, PE:PE + BV]                         # block-diag output_fc
    g = whead_ref[BE + 0:BE + 1, 0:BE]
    b = whead_ref[BE + 1:BE + 2, 0:BE]
    b_o = whead_ref[BE + 0:BE + 1, PE:PE + BV]

    mu = jnp.dot(x, m_e, preferred_element_type=jnp.float32)
    xc = x - mu
    var = jnp.dot(xc * xc, m_e, preferred_element_type=jnp.float32)
    y = xc * jax.lax.rsqrt(var + LN_EPS) * g + b
    out_ref[...] = jnp.dot(y, w_o, preferred_element_type=jnp.float32) + b_o


# --------------------------- host-side param packing --------------------------
def _block_diag(blocks):
    blocks = [np.asarray(b, np.float64) for b in blocks]
    r = sum(b.shape[0] for b in blocks)
    c = sum(b.shape[1] for b in blocks)
    out = np.zeros((r, c))
    ro = co = 0
    for b in blocks:
        out[ro:ro + b.shape[0], co:co + b.shape[1]] = b
        ro += b.shape[0]
        co += b.shape[1]
    return out


def _bblock(w, B):      # block-diagonal over batch
    return np.kron(np.eye(B), np.asarray(w, np.float64))


def _btile(v, B):       # tile a vector over batch lanes
    return np.tile(np.asarray(v, np.float64), B)


def _padc(a, width):    # zero-pad columns (2-D) or length (1-D)
    a = np.asarray(a, np.float64)
    if a.ndim == 1:
        out = np.zeros((width,))
        out[:a.shape[0]] = a
        return out
    out = np.zeros((a.shape[0], width))
    out[:, :a.shape[1]] = a
    return out


def _padr(a, rows):     # zero-pad rows
    a = np.asarray(a, np.float64)
    out = np.zeros((rows, a.shape[1]))
    out[:a.shape[0]] = a
    return out


def pack_layer(p, B):
    """Pack the 21 layer parameters into 3 VMEM slabs (all folding in fp64)."""
    E, D = p["wd"].shape
    H = p["wa"].shape[0]
    HD, F = H * D, 4 * D
    BE, BD, BHD, BF = B * E, B * D, B * HD, B * F
    PD = _pad128(BD)

    g = lambda k: np.asarray(p[k], np.float64)
    wa, ba, wb, bb = g("wa"), g("ba"), g("wb"), g("bb")
    wc, bc, wd, bd = g("wc"), g("bc"), g("wd"), g("bd")
    hw, lng, lnb = g("hw"), g("lng"), g("lnb")
    w1, b1, w2, b2 = g("w1"), g("b1"), g("w2"), g("b2")
    wp, bp, ng, nb = g("wp"), g("bp"), g("ng"), g("nb")

    wa_cat = np.concatenate(list(wa), axis=1)                 # (E, HD)
    wb_cat = np.concatenate(list(wb), axis=1)
    ba_cat = np.concatenate(list(ba))
    bb_cat = np.concatenate(list(bb))
    bc_cat = np.concatenate(list(bc))
    wd_rep = np.tile(wd, (1, H))                              # (E, HD)
    bd_rep = np.tile(bd, H)
    mseg_h = _block_diag([np.full((D, D), 1.0 / D)] * H)      # per-head mean (HD, HD)
    md = np.full((D, D), 1.0 / D)                             # mean over D

    # ---- slab 1: pre-scan weights + all bias / affine rows -------------------
    # column segments: [A | B | OC | OCM | DXD(pad128) | DXDM(pad128)]
    segs_w = [_bblock(wa_cat, B), _bblock(wb_cat, B), _bblock(wd_rep, B),
              _bblock(wd_rep @ mseg_h, B),
              _padc(_bblock(wd / H, B), PD),
              _padc(_bblock((wd @ md) / H, B), PD)]
    segs_b = [_btile(ba_cat, B), _btile(bb_cat, B), _btile(bd_rep + bc_cat, B),
              _btile((bd_rep + bc_cat) @ mseg_h, B),
              _padc(_btile(bd / H, B), PD),
              _padc(_btile((bd @ md) / H, B), PD)]
    w_pre = np.concatenate(segs_w, axis=1)                    # (BE, 4*BHD + 2*PD)
    b_pre = np.concatenate(segs_b)
    WPRE = w_pre.shape[1]

    g_fold = np.concatenate([lng[i] * (hw[i] / H) for i in range(H)])   # hw/H folded
    bt_fold = np.concatenate([lnb[i] * (hw[i] / H) for i in range(H)])
    b_t1 = np.concatenate([_btile(b1, B), _padc(_btile(b2 @ wp + bp, B), PD)])

    rows = np.stack([b_pre,
                     _padc(_btile(g_fold, B), WPRE),
                     _padc(_btile(bt_fold, B), WPRE),
                     _padc(_btile(ng, B), WPRE),
                     _padc(_btile(nb, B), WPRE),
                     _padc(b_t1, WPRE)], axis=0)
    w_pre_slab = np.concatenate([w_pre, rows], axis=0)        # (BE + 6, WPRE)

    # ---- slab 2: post-scan weights (rows = max(BHD, BF), no F==HD coupling) --
    wc_bd = _bblock(_block_diag(list(wc)), B)                 # (BHD, BHD)
    mseg_b = _bblock(mseg_h, B)                               # (BHD, BHD)
    s_sum = _bblock(np.tile(np.eye(D), (H, 1)), B)            # (BHD, BD) head-sum
    md_b = _bblock(md, B)                                     # (BD, BD)
    w_z = np.concatenate([_padc(s_sum, PD), _padc(s_sum @ md_b, PD)], axis=1)
    w2wp = _bblock(w2 @ wp, B)                                # (BF, BD) proj folded

    R = max(BHD, BF)
    w_big = np.concatenate([
        _padr(np.concatenate([wc_bd, wc_bd @ mseg_b], axis=1), R),   # [0, 2*BHD)
        _padr(mseg_b, R),                                            # [2*BHD, 3*BHD)
        _padr(w_z, R),                                               # [3*BHD, +2*PD)
        _padr(_padc(w2wp, PD), R),                                   # [.., +PD)
    ], axis=1)

    # ---- slab 3: tail weights (rows = BD) -------------------------------------
    w_small = np.concatenate([
        _bblock(w1, B),                                       # [0, BF)
        _padc(_bblock(wp, B), PD),                            # [BF, BF+PD)
        _padc(md_b, PD),                                      # [BF+PD, BF+2*PD)
    ], axis=1)

    f32 = lambda a: jnp.asarray(np.asarray(a, np.float32))
    return dict(w_pre=f32(w_pre_slab), w_big=f32(w_big), w_small=f32(w_small))


def pack_head(hp, B, E, V):
    BE, BV = B * E, B * V
    PE = _pad128(BE)
    ng, nb = np.asarray(hp["ng"], np.float64), np.asarray(hp["nb"], np.float64)
    wo, bo = np.asarray(hp["wo"], np.float64), np.asarray(hp["bo"], np.float64)
    m_e = _bblock(np.full((E, E), 1.0 / E), B)                # (BE, BE)
    top = np.concatenate([_padc(m_e, PE), _bblock(wo, B)], axis=1)   # (BE, PE+BV)
    row0 = np.concatenate([_padc(_btile(ng, B), PE), _btile(bo, B)])
    row1 = np.concatenate([_padc(_btile(nb, B), PE), np.zeros(BV)])
    slab = np.concatenate([top, row0[None], row1[None]], axis=0)     # (BE+2, PE+BV)
    return jnp.asarray(np.asarray(slab, np.float32))


# ------------------------------- wrappers -------------------------------------
def run_layer(x_lb, slabs, *, B, E, D, H, L):
    vmem = pl.BlockSpec(memory_space=pltpu.MemorySpace.VMEM)
    return pl.pallas_call(
        functools.partial(mamba_layer_kernel, B=B, E=E, D=D, H=H),
        out_shape=jax.ShapeDtypeStruct((L, B * D), jnp.float32),
        in_specs=[vmem, vmem, vmem, vmem],
        out_specs=vmem,
    )(x_lb, slabs["w_pre"], slabs["w_big"], slabs["w_small"])


def run_head(x_lb, head_slab, *, B, E, V, L):
    vmem = pl.BlockSpec(memory_space=pltpu.MemorySpace.VMEM)
    return pl.pallas_call(
        functools.partial(head_kernel, B=B, E=E, V=V),
        out_shape=jax.ShapeDtypeStruct((L, B * V), jnp.float32),
        in_specs=[vmem, vmem],
        out_specs=vmem,
    )(x_lb, head_slab)


def mamba_pp_ml_forward(tokens, emb_tab, packed_layers, head_slab,
                        *, B, L, E, D, H, V):
    assert D == E, "MambaPlusPlusML needs hidden_dim == embed_dim to stack layers"
    # TODO(synk): the nn.Embedding gather is a trivial table lookup; it is done
    # host-side with jnp.take instead of an in-kernel DMA gather at this size.
    x = jnp.take(emb_tab, tokens, axis=0)                      # (B, L, E)
    x = jnp.transpose(x, (1, 0, 2)).reshape(L, B * E)          # time-major, batch-blocked
    for slabs in packed_layers:
        x = run_layer(x, slabs, B=B, E=E, D=D, H=H, L=L)       # (L, B*D), D == E
    logits = run_head(x, head_slab, B=B, E=E, V=V, L=L)        # (L, B*V)
    return jnp.transpose(logits.reshape(L, B, V), (1, 0, 2))   # (B, L, V)


# --------------------------- pure-JAX reference -------------------------------
def _mm(a, b):
    return jnp.dot(a, b, precision=jax.lax.Precision.HIGHEST)


def _ln_ref(x, g, b):
    mu = x.mean(-1, keepdims=True)
    var = ((x - mu) ** 2).mean(-1, keepdims=True)
    return (x - mu) / jnp.sqrt(var + LN_EPS) * g + b


def reference_layer(x, p):
    B, L, _ = x.shape
    H, _, D = p["wa"].shape
    h = [jnp.zeros((B, D), jnp.float32) for _ in range(H)]
    outs = []
    for t in range(L):
        x_t = x[:, t]
        dx = _mm(x_t, p["wd"]) + p["bd"]
        s = dx
        for i in range(H):
            a = jnp.tanh(_mm(x_t, p["wa"][i]) + p["ba"][i])
            bt = _mm(x_t, p["wb"][i]) + p["bb"][i]
            h[i] = a * h[i] + bt
            o = _mm(h[i], p["wc"][i]) + p["bc"][i] + dx
            o = _ln_ref(o, p["lng"][i], p["lnb"][i])
            s = s + p["hw"][i] * o
        outs.append((s / H)[:, None, :])
    z = jnp.concatenate(outs, axis=1)
    u = z + _ln_ref(z, p["ng"], p["nb"])
    f = jax.nn.gelu(_mm(u, p["w1"]) + p["b1"], approximate=False)
    o = _mm(f, p["w2"]) + p["b2"]
    return _mm(u + o, p["wp"]) + p["bp"]


def reference_model(tokens, emb_tab, layer_ps, head_p):
    x = jnp.take(emb_tab, tokens, axis=0)
    for p in layer_ps:
        x = reference_layer(x, p)
    y = _ln_ref(x, head_p["ng"], head_p["nb"])
    return _mm(y, head_p["wo"]) + head_p["bo"]


# --------------------------- parameter construction ---------------------------
def init_layer_params(key, E, D, H):
    """PyTorch-style init. head_weights / LayerNorm affines are perturbed away from
    their defaults (ones / zeros) so the host-side folding is actually exercised."""
    ks = jax.random.split(key, 20)
    F = 4 * D

    def unif(k, shape, fan_in):
        b = 1.0 / math.sqrt(fan_in)
        return jax.random.uniform(k, shape, jnp.float32, -b, b)

    return {
        "wa": unif(ks[0], (H, E, D), E), "ba": unif(ks[1], (H, D), E),
        "wb": unif(ks[2], (H, E, D), E), "bb": unif(ks[3], (H, D), E),
        "wc": unif(ks[4], (H, D, D), D), "bc": unif(ks[5], (H, D), D),
        "wd": unif(ks[6], (E, D), E), "bd": unif(ks[7], (D,), E),
        "w1": unif(ks[8], (D, F), D), "b1": unif(ks[9], (F,), D),
        "w2": unif(ks[10], (F, D), F), "b2": unif(ks[11], (D,), F),
        "wp": unif(ks[12], (D, D), D), "bp": unif(ks[13], (D,), D),
        "hw": 1.0 + 0.1 * jax.random.normal(ks[14], (H,), jnp.float32),
        "lng": 1.0 + 0.1 * jax.random.normal(ks[15], (H, D), jnp.float32),
        "lnb": 0.1 * jax.random.normal(ks[16], (H, D), jnp.float32),
        "ng": 1.0 + 0.1 * jax.random.normal(ks[17], (D,), jnp.float32),
        "nb": 0.1 * jax.random.normal(ks[18], (D,), jnp.float32),
    }


def init_head_params(key, E, V):
    k1, k2, k3, k4 = jax.random.split(key, 4)
    b = 1.0 / math.sqrt(E)
    return {
        "ng": 1.0 + 0.1 * jax.random.normal(k3, (E,), jnp.float32),
        "nb": 0.1 * jax.random.normal(k4, (E,), jnp.float32),
        "wo": jax.random.uniform(k1, (E, V), jnp.float32, -b, b),
        "bo": jax.random.uniform(k2, (V,), jnp.float32, -b, b),
    }


# ---------------------------------- main --------------------------------------
if __name__ == "__main__":
    key = jax.random.PRNGKey(0)
    k_tok, k_emb, k_head, *k_layers = jax.random.split(key, 3 + NUM_LAYERS)

    tokens = jax.random.randint(k_tok, (BATCH, SEQ), 0, VOCAB)
    emb_tab = jax.random.normal(k_emb, (VOCAB, EMBED_DIM), jnp.float32)
    emb_tab = emb_tab.at[0].set(0.0)        # nn.Embedding(padding_idx=0)

    layer_ps = [init_layer_params(k, EMBED_DIM, HIDDEN_DIM, NUM_HEADS)
                for k in k_layers]
    head_p = init_head_params(k_head, EMBED_DIM, VOCAB)

    packed_layers = [pack_layer(p, BATCH) for p in layer_ps]
    head_slab = pack_head(head_p, BATCH, EMBED_DIM, VOCAB)

    out = mamba_pp_ml_forward(tokens, emb_tab, packed_layers, head_slab,
                              B=BATCH, L=SEQ, E=EMBED_DIM, D=HIDDEN_DIM,
                              H=NUM_HEADS, V=VOCAB)
    out = jax.block_until_ready(out)

    ref = reference_model(tokens, emb_tab, layer_ps, head_p)
    assert out.shape == (BATCH, SEQ, VOCAB)
    # Tolerance accommodates MXU f32 multi-pass rounding (kernel) vs the
    # precision=HIGHEST XLA reference across 2 stacked layers plus the rational-erf
    # GELU; a packing / wiring bug would be orders of magnitude larger.
    max_err = float(jnp.max(jnp.abs(out - ref)))
    assert jnp.allclose(out, ref, rtol=2e-2, atol=2e-2), max_err

    print("KERNEL_OK")
</pallas_src>

<mosaic_0001>
module attributes {stable_mosaic.version = 11 : i64} {
  func.func @mamba_layer_kernel(%arg0: memref<8x64xf32, #tpu.memory_space<vmem>>, %arg1: memref<70x1280xf32, #tpu.memory_space<vmem>>, %arg2: memref<256x1152xf32, #tpu.memory_space<vmem>>, %arg3: memref<64x512xf32, #tpu.memory_space<vmem>>, %arg4: memref<8x64xf32, #tpu.memory_space<vmem>>) attributes {dimension_semantics = [], scalar_prefetch = 0 : i64, scratch_operands = 0 : i64, tpu.core_type = #tpu.core_type<tc>} {
    %c0 = arith.constant 0 : index
    %c0_0 = arith.constant 0 : index
    %0 = vector.load %arg0[%c0, %c0_0] : memref<8x64xf32, #tpu.memory_space<vmem>>, vector<8x64xf32>
    %c0_1 = arith.constant 0 : index
    %c0_2 = arith.constant 0 : index
    %1 = vector.load %arg1[%c0_1, %c0_2] : memref<70x1280xf32, #tpu.memory_space<vmem>>, vector<64x1280xf32>
    %c64 = arith.constant 64 : index
    %c0_3 = arith.constant 0 : index
    %2 = vector.load %arg1[%c64, %c0_3] : memref<70x1280xf32, #tpu.memory_space<vmem>>, vector<1x1280xf32>
    %c65 = arith.constant 65 : index
    %c0_4 = arith.constant 0 : index
    %3 = vector.load %arg1[%c65, %c0_4] : memref<70x1280xf32, #tpu.memory_space<vmem>>, vector<1x256xf32>
    %c66 = arith.constant 66 : index
    %c0_5 = arith.constant 0 : index
    %4 = vector.load %arg1[%c66, %c0_5] : memref<70x1280xf32, #tpu.memory_space<vmem>>, vector<1x256xf32>
    %c67 = arith.constant 67 : index
    %c0_6 = arith.constant 0 : index
    %5 = vector.load %arg1[%c67, %c0_6] : memref<70x1280xf32, #tpu.memory_space<vmem>>, vector<1x64xf32>
    %c68 = arith.constant 68 : index
    %c0_7 = arith.constant 0 : index
    %6 = vector.load %arg1[%c68, %c0_7] : memref<70x1280xf32, #tpu.memory_space<vmem>>, vector<1x64xf32>
    %c69 = arith.constant 69 : index
    %c0_8 = arith.constant 0 : index
    %7 = vector.load %arg1[%c69, %c0_8] : memref<70x1280xf32, #tpu.memory_space<vmem>>, vector<1x384xf32>
    %cst = arith.constant dense<0.000000e+00> : vector<8x1280xf32>
    %8 = tpu.matmul %0, %1, %cst {dimension_numbers = #tpu.dot_dimension_numbers<[1], [0], [0], [1], [0, 0, 1, 1], [], []>} : vector<8x64xf32>, vector<64x1280xf32>, vector<8x1280xf32> -> vector<8x1280xf32>
    %9 = vector.broadcast %2 : vector<1x1280xf32> to vector<8x1280xf32>
    %10 = arith.addf %8, %9 : vector<8x1280xf32>
    %11 = vector.extract_strided_slice %10 {offsets = [0, 0], sizes = [8, 256], strides = [1, 1]} : vector<8x1280xf32> to vector<8x256xf32>
    %12 = math.tanh %11 : vector<8x256xf32>
    %13 = vector.extract_strided_slice %10 {offsets = [0, 256], sizes = [8, 256], strides = [1, 1]} : vector<8x1280xf32> to vector<8x256xf32>
    %14 = vector.extract_strided_slice %10 {offsets = [0, 512], sizes = [8, 256], strides = [1, 1]} : vector<8x1280xf32> to vector<8x256xf32>
    %15 = vector.extract_strided_slice %10 {offsets = [0, 768], sizes = [8, 256], strides = [1, 1]} : vector<8x1280xf32> to vector<8x256xf32>
    %16 = vector.extract_strided_slice %10 {offsets = [0, 1024], sizes = [8, 64], strides = [1, 1]} : vector<8x1280xf32> to vector<8x64xf32>
    %17 = vector.extract_strided_slice %10 {offsets = [0, 1152], sizes = [8, 64], strides = [1, 1]} : vector<8x1280xf32> to vector<8x64xf32>
    %cst_9 = arith.constant 0.000000e+00 : f32
    %18 = vector.broadcast %cst_9 : f32 to vector<1x256xf32>
    %19 = vector.extract_strided_slice %12 {offsets = [0, 0], sizes = [1, 256], strides = [1, 1]} : vector<8x256xf32> to vector<1x256xf32>
    %20 = arith.mulf %19, %18 : vector<1x256xf32>
    %21 = vector.extract_strided_slice %13 {offsets = [0, 0], sizes = [1, 256], strides = [1, 1]} : vector<8x256xf32> to vector<1x256xf32>
    %22 = arith.addf %20, %21 : vector<1x256xf32>
    %23 = vector.extract_strided_slice %12 {offsets = [1, 0], sizes = [1, 256], strides = [1, 1]} : vector<8x256xf32> to vector<1x256xf32>
    %24 = arith.mulf %23, %22 : vector<1x256xf32>
    %25 = vector.extract_strided_slice %13 {offsets = [1, 0], sizes = [1, 256], strides = [1, 1]} : vector<8x256xf32> to vector<1x256xf32>
    %26 = arith.addf %24, %25 : vector<1x256xf32>
    %27 = vector.extract_strided_slice %12 {offsets = [2, 0], sizes = [1, 256], strides = [1, 1]} : vector<8x256xf32> to vector<1x256xf32>
    %28 = arith.mulf %27, %26 : vector<1x256xf32>
    %29 = vector.extract_strided_slice %13 {offsets = [2, 0], sizes = [1, 256], strides = [1, 1]} : vector<8x256xf32> to vector<1x256xf32>
    %30 = arith.addf %28, %29 : vector<1x256xf32>
    %31 = vector.extract_strided_slice %12 {offsets = [3, 0], sizes = [1, 256], strides = [1, 1]} : vector<8x256xf32> to vector<1x256xf32>
    %32 = arith.mulf %31, %30 : vector<1x256xf32>
    %33 = vector.extract_strided_slice %13 {offsets = [3, 0], sizes = [1, 256], strides = [1, 1]} : vector<8x256xf32> to vector<1x256xf32>
    %34 = arith.addf %32, %33 : vector<1x256xf32>
    %35 = vector.extract_strided_slice %12 {offsets = [4, 0], sizes = [1, 256], strides = [1, 1]} : vector<8x256xf32> to vector<1x256xf32>
    %36 = arith.mulf %35, %34 : vector<1x256xf32>
    %37 = vector.extract_strided_slice %13 {offsets = [4, 0], sizes = [1, 256], strides = [1, 1]} : vector<8x256xf32> to vector<1x256xf32>
    %38 = arith.addf %36, %37 : vector<1x256xf32>
    %39 = vector.extract_strided_slice %12 {offsets = [5, 0], sizes = [1, 256], strides = [1, 1]} : vector<8x256xf32> to vector<1x256xf32>
    %40 = arith.mulf %39, %38 : vector<1x256xf32>
    %41 = vector.extract_strided_slice %13 {offsets = [5, 0], sizes = [1, 256], strides = [1, 1]} : vector<8x256xf32> to vector<1x256xf32>
    %42 = arith.addf %40, %41 : vector<1x256xf32>
    %43 = vector.extract_strided_slice %12 {offsets = [6, 0], sizes = [1, 256], strides = [1, 1]} : vector<8x256xf32> to vector<1x256xf32>
    %44 = arith.mulf %43, %42 : vector<1x256xf32>
    %45 = vector.extract_strided_slice %13 {offsets = [6, 0], sizes = [1, 256], strides = [1, 1]} : vector<8x256xf32> to vector<1x256xf32>
    %46 = arith.addf %44, %45 : vector<1x256xf32>
    %47 = vector.extract_strided_slice %12 {offsets = [7, 0], sizes = [1, 256], strides = [1, 1]} : vector<8x256xf32> to vector<1x256xf32>
    %48 = arith.mulf %47, %46 : vector<1x256xf32>
    %49 = vector.extract_strided_slice %13 {offsets = [7, 0], sizes = [1, 256], strides = [1, 1]} : vector<8x256xf32> to vector<1x256xf32>
    %50 = arith.addf %48, %49 : vector<1x256xf32>
    %51 = tpu.concatenate %22, %26, %30, %34, %38, %42, %46, %50 in 0 : vector<1x256xf32>, vector<1x256xf32>, vector<1x256xf32>, vector<1x256xf32>, vector<1x256xf32>, vector<1x256xf32>, vector<1x256xf32>, vector<1x256xf32> -> vector<8x256xf32>
    %c0_10 = arith.constant 0 : index
    %c0_11 = arith.constant 0 : index
    %52 = vector.load %arg2[%c0_10, %c0_11] : memref<256x1152xf32, #tpu.memory_space<vmem>>, vector<256x512xf32>
    %cst_12 = arith.constant dense<0.000000e+00> : vector<8x512xf32>
    %53 = tpu.matmul %51, %52, %cst_12 {dimension_numbers = #tpu.dot_dimension_numbers<[1], [0], [0], [1], [0, 0, 1, 1], [], []>} : vector<8x256xf32>, vector<256x512xf32>, vector<8x512xf32> -> vector<8x512xf32>
    %54 = vector.extract_strided_slice %53 {offsets = [0, 0], sizes = [8, 256], strides = [1, 1]} : vector<8x512xf32> to vector<8x256xf32>
    %55 = arith.addf %54, %14 : vector<8x256xf32>
    %56 = vector.extract_strided_slice %53 {offsets = [0, 256], sizes = [8, 256], strides = [1, 1]} : vector<8x512xf32> to vector<8x256xf32>
    %57 = arith.addf %56, %15 : vector<8x256xf32>
    %58 = arith.subf %55, %57 : vector<8x256xf32>
    %59 = arith.mulf %58, %58 : vector<8x256xf32>
    %c0_13 = arith.constant 0 : index
    %c512 = arith.constant 512 : index
    %60 = vector.load %arg2[%c0_13, %c512] : memref<256x1152xf32, #tpu.memory_space<vmem>>, vector<256x256xf32>
    %cst_14 = arith.constant dense<0.000000e+00> : vector<8x256xf32>
    %61 = tpu.matmul %59, %60, %cst_14 {dimension_numbers = #tpu.dot_dimension_numbers<[1], [0], [0], [1], [0, 0, 1, 1], [], []>} : vector<8x256xf32>, vector<256x256xf32>, vector<8x256xf32> -> vector<8x256xf32>
    %cst_15 = arith.constant 9.99999974E-6 : f32
    %62 = vector.broadcast %cst_15 : f32 to vector<8x256xf32>
    %63 = arith.addf %61, %62 : vector<8x256xf32>
    %64 = math.rsqrt %63 : vector<8x256xf32>
    %65 = arith.mulf %58, %64 : vector<8x256xf32>
    %66 = vector.broadcast %3 : vector<1x256xf32> to vector<8x256xf32>
    %67 = arith.mulf %65, %66 : vector<8x256xf32>
    %68 = vector.broadcast %4 : vector<1x256xf32> to vector<8x256xf32>
    %69 = arith.addf %67, %68 : vector<8x256xf32>
    %c0_16 = arith.constant 0 : index
    %c768 = arith.constant 768 : index
    %70 = vector.load %arg2[%c0_16, %c768] : memref<256x1152xf32, #tpu.memory_space<vmem>>, vector<256x256xf32>
    %cst_17 = arith.constant dense<0.000000e+00> : vector<8x256xf32>
    %71 = tpu.matmul %69, %70, %cst_17 {dimension_numbers = #tpu.dot_dimension_numbers<[1], [0], [0], [1], [0, 0, 1, 1], [], []>} : vector<8x256xf32>, vector<256x256xf32>, vector<8x256xf32> -> vector<8x256xf32>
    %72 = vector.extract_strided_slice %71 {offsets = [0, 0], sizes = [8, 64], strides = [1, 1]} : vector<8x256xf32> to vector<8x64xf32>
    %73 = arith.addf %72, %16 : vector<8x64xf32>
    %74 = vector.extract_strided_slice %71 {offsets = [0, 128], sizes = [8, 64], strides = [1, 1]} : vector<8x256xf32> to vector<8x64xf32>
    %75 = arith.addf %74, %17 : vector<8x64xf32>
    %76 = arith.subf %73, %75 : vector<8x64xf32>
    %77 = arith.mulf %76, %76 : vector<8x64xf32>
    %c0_18 = arith.constant 0 : index
    %c384 = arith.constant 384 : index
    %78 = vector.load %arg3[%c0_18, %c384] : memref<64x512xf32, #tpu.memory_space<vmem>>, vector<64x64xf32>
    %cst_19 = arith.constant dense<0.000000e+00> : vector<8x64xf32>
    %79 = tpu.matmul %77, %78, %cst_19 {dimension_numbers = #tpu.dot_dimension_numbers<[1], [0], [0], [1], [0, 0, 1, 1], [], []>} : vector<8x64xf32>, vector<64x64xf32>, vector<8x64xf32> -> vector<8x64xf32>
    %cst_20 = arith.constant 9.99999974E-6 : f32
    %80 = vector.broadcast %cst_20 : f32 to vector<8x64xf32>
    %81 = arith.addf %79, %80 : vector<8x64xf32>
    %82 = math.rsqrt %81 : vector<8x64xf32>
    %83 = arith.mulf %76, %82 : vector<8x64xf32>
    %84 = vector.broadcast %5 : vector<1x64xf32> to vector<8x64xf32>
    %85 = arith.mulf %83, %84 : vector<8x64xf32>
    %86 = arith.addf %73, %85 : vector<8x64xf32>
    %87 = vector.broadcast %6 : vector<1x64xf32> to vector<8x64xf32>
    %88 = arith.addf %86, %87 : vector<8x64xf32>
    %c0_21 = arith.constant 0 : index
    %c0_22 = arith.constant 0 : index
    %89 = vector.load %arg3[%c0_21, %c0_22] : memref<64x512xf32, #tpu.memory_space<vmem>>, vector<64x384xf32>
    %cst_23 = arith.constant dense<0.000000e+00> : vector<8x384xf32>
    %90 = tpu.matmul %88, %89, %cst_23 {dimension_numbers = #tpu.dot_dimension_numbers<[1], [0], [0], [1], [0, 0, 1, 1], [], []>} : vector<8x64xf32>, vector<64x384xf32>, vector<8x384xf32> -> vector<8x384xf32>
    %91 = vector.broadcast %7 : vector<1x384xf32> to vector<8x384xf32>
    %92 = arith.addf %90, %91 : vector<8x384xf32>
    %93 = vector.extract_strided_slice %92 {offsets = [0, 0], sizes = [8, 256], strides = [1, 1]} : vector<8x384xf32> to vector<8x256xf32>
    %cst_24 = arith.constant 5.000000e-01 : f32
    %94 = vector.broadcast %cst_24 : f32 to vector<8x256xf32>
    %95 = arith.mulf %94, %93 : vector<8x256xf32>
    %cst_25 = arith.constant 0.707106769 : f32
    %96 = vector.broadcast %cst_25 : f32 to vector<8x256xf32>
    %97 = arith.mulf %93, %96 : vector<8x256xf32>
    %cst_26 = arith.constant 0.000000e+00 : f32
    %98 = vector.broadcast %cst_26 : f32 to vector<8x256xf32>
    %99 = arith.cmpf oge, %97, %98 : vector<8x256xf32>
    %cst_27 = arith.constant 1.000000e+00 : f32
    %cst_28 = arith.constant -1.000000e+00 : f32
    %100 = vector.broadcast %cst_27 : f32 to vector<8x256xf32>
    %101 = vector.broadcast %cst_28 : f32 to vector<8x256xf32>
    %102 = arith.select %99, %100, %101 : vector<8x256xi1>, vector<8x256xf32>
    %103 = math.absf %97 : vector<8x256xf32>
    %cst_29 = arith.constant 0.327591091 : f32
    %104 = vector.broadcast %cst_29 : f32 to vector<8x256xf32>
    %105 = arith.mulf %104, %103 : vector<8x256xf32>
    %cst_30 = arith.constant 1.000000e+00 : f32
    %106 = vector.broadcast %cst_30 : f32 to vector<8x256xf32>
    %107 = arith.addf %106, %105 : vector<8x256xf32>
    %cst_31 = arith.constant 1.000000e+00 : f32
    %108 = vector.broadcast %cst_31 : f32 to vector<8x256xf32>
    %109 = arith.divf %108, %107 : vector<8x256xf32>
    %cst_32 = arith.constant 1.06140542 : f32
    %110 = vector.broadcast %cst_32 : f32 to vector<8x256xf32>
    %111 = arith.mulf %110, %109 : vector<8x256xf32>
    %cst_33 = arith.constant -1.45315206 : f32
    %112 = vector.broadcast %cst_33 : f32 to vector<8x256xf32>
    %113 = arith.addf %111, %112 : vector<8x256xf32>
    %114 = arith.mulf %113, %109 : vector<8x256xf32>
    %cst_34 = arith.constant 1.42141378 : f32
    %115 = vector.broadcast %cst_34 : f32 to vector<8x256xf32>
    %116 = arith.addf %114, %115 : vector<8x256xf32>
    %117 = arith.mulf %116, %109 : vector<8x256xf32>
    %cst_35 = arith.constant -0.284496725 : f32
    %118 = vector.broadcast %cst_35 : f32 to vector<8x256xf32>
    %119 = arith.addf %117, %118 : vector<8x256xf32>
    %120 = arith.mulf %119, %109 : vector<8x256xf32>
    %cst_36 = arith.constant 0.254829586 : f32
    %121 = vector.broadcast %cst_36 : f32 to vector<8x256xf32>
    %122 = arith.addf %120, %121 : vector<8x256xf32>
    %123 = arith.mulf %122, %109 : vector<8x256xf32>
    %cst_37 = arith.constant 0.000000e+00 : f32
    %124 = vector.broadcast %cst_37 : f32 to vector<8x256xf32>
    %125 = arith.subf %124, %103 : vector<8x256xf32>
    %126 = arith.mulf %125, %103 : vector<8x256xf32>
    %127 = math.exp %126 : vector<8x256xf32>
    %128 = arith.mulf %123, %127 : vector<8x256xf32>
    %cst_38 = arith.constant 1.000000e+00 : f32
    %129 = vector.broadcast %cst_38 : f32 to vector<8x256xf32>
    %130 = arith.subf %129, %128 : vector<8x256xf32>
    %131 = arith.mulf %102, %130 : vector<8x256xf32>
    %cst_39 = arith.constant 1.000000e+00 : f32
    %132 = vector.broadcast %cst_39 : f32 to vector<8x256xf32>
    %133 = arith.addf %132, %131 : vector<8x256xf32>
    %134 = arith.mulf %95, %133 : vector<8x256xf32>
    %135 = vector.extract_strided_slice %92 {offsets = [0, 256], sizes = [8, 64], strides = [1, 1]} : vector<8x384xf32> to vector<8x64xf32>
    %c0_40 = arith.constant 0 : index
    %c1024 = arith.constant 1024 : index
    %136 = vector.load %arg2[%c0_40, %c1024] : memref<256x1152xf32, #tpu.memory_space<vmem>>, vector<256x64xf32>
    %cst_41 = arith.constant dense<0.000000e+00> : vector<8x64xf32>
    %137 = tpu.matmul %134, %136, %cst_41 {dimension_numbers = #tpu.dot_dimension_numbers<[1], [0], [0], [1], [0, 0, 1, 1], [], []>} : vector<8x256xf32>, vector<256x64xf32>, vector<8x64xf32> -> vector<8x64xf32>
    %138 = arith.addf %135, %137 : vector<8x64xf32>
    %c0_42 = arith.constant 0 : index
    %c0_43 = arith.constant 0 : index
    %139 = vector.load %arg4[%c0_42, %c0_43] : memref<8x64xf32, #tpu.memory_space<vmem>>, vector<8x64xf32>
    tpu.vector_store %arg4[%c0_42, %c0_43], %138 {strides = array<i32>} : memref<8x64xf32, #tpu.memory_space<vmem>>, vector<8x64xf32>,
    return
  }
}

</mosaic_0001>

<llo_original>
// kernel: tpu_custom_call.1
$region0: #{tpu_custom_call.1}
  #allocation0 [shape = 'u32[]', space=smem, size = 0x4, offset = 0x4, fixed_abs, tag = 'smem constant byte address 0x4 - core index']
  #allocation1 [shape = 'u32[144,128]{1,0:T(1,128)}', space=vmem, size = 0x12000, scoped, tag = 'internal scratch']
  %s0 = inlined_call_operand.hbm [shape: f32[8,64], index: 0, kind: input, shape index: {}]
  %s1 = inlined_call_operand.hbm [shape: f32[70,1280], index: 1, kind: input, shape index: {}]
  %s2 = inlined_call_operand.hbm [shape: f32[256,1152], index: 2, kind: input, shape index: {}]
  %s3 = inlined_call_operand.hbm [shape: f32[64,512], index: 3, kind: input, shape index: {}]
  %s4 = inlined_call_operand.hbm [shape: f32[8,64], index: 4, kind: output, shape index: {}]
  %s5 = sld [smem:[#allocation0]]
  $region42: #{tpu_custom_call.1} parent=0
    _
  %s7 = ssub.s32 1, %s5
  %s8 = scalar_select 0, %s7, %s5
  $region1: #{tpu_custom_call.1} parent=0
    #allocation2 [shape = 'u8[4096]{0}', space=vmem, size = 0x1000, scoped, tag = 'input window, operand 0, single buffered']
    #allocation3 [shape = 's32[1]{0}', space=sflag, size = 0x4, scoped, tag = 'scoped memory for tpu_custom_call.1']
    #allocation4 [shape = 's32[1]{0}', space=sflag, size = 0x4, scoped, tag = 'scoped memory for tpu_custom_call.1']
    #allocation5 [shape = 'u8[368640]{0}', space=vmem, size = 0x5a000, scoped, tag = 'input window, operand 1, single buffered']
    #allocation6 [shape = 's32[1]{0}', space=sflag, size = 0x4, scoped, tag = 'scoped memory for tpu_custom_call.1']
    #allocation7 [shape = 'u8[1179648]{0}', space=vmem, size = 0x120000, scoped, tag = 'input window, operand 2, single buffered']
    #allocation8 [shape = 'u8[131072]{0}', space=vmem, size = 0x20000, scoped, tag = 'input window, operand 3, single buffered']
    #allocation9 [shape = 's32[1]{0}', space=sflag, size = 0x4, scoped, tag = 'scoped memory for tpu_custom_call.1']
    #allocation10 [shape = 'u8[4096]{0}', space=vmem, size = 0x1000, scoped, tag = 'output window, operand 0, single buffered']
    %9 = vsyncpa [#allocation3], 0
    %10 = vsyncpa [#allocation6], 0
    %11 = vsyncpa [#allocation9], 0
    %12 = vsyncpa [#allocation4], 0
    // Predicated region
    $region2: #{tpu_custom_call.1} parent=1 // pred_check
      _
    $region3: #{tpu_custom_call.1} parent=1 // pred_check_branch
      %14 = sbr.rel (0) target = $region5
    $region4: #{tpu_custom_call.1} parent=1 // pred_region
      %s16 = ssub.s32 128, 128
      %17 = vsyncadd [#allocation3], %s16
      %s19 = sshll.u32 [#allocation2], 4
      %s20 = int_to_ptr.vmem [resolvable:$true] %s19
      %22 = dma.hbm_to_vmem [thread:$0]  %s0, 128, %s20, [#allocation3]
    $region5: #{tpu_custom_call.1} parent=1 // pred_fallthru
      _
    // Predicated region
    $region6: #{tpu_custom_call.1} parent=1 // pred_check
      _
    $region7: #{tpu_custom_call.1} parent=1 // pred_check_branch
      %24 = sbr.rel (0) target = $region9
    $region8: #{tpu_custom_call.1} parent=1 // pred_region
      %s26 = ssub.s32 11520, 11520
      %27 = vsyncadd [#allocation6], %s26
      %s28 = sshll.u32 [#allocation5], 4
      %s29 = int_to_ptr.vmem [resolvable:$true] %s28
      %34 = dma.hbm_to_vmem [thread:$0]  %s1, 11520, %s29, [#allocation6], 1280, 1280, 80
    $region9: #{tpu_custom_call.1} parent=1 // pred_fallthru
      _
    // Predicated region
    $region10: #{tpu_custom_call.1} parent=1 // pred_check
      _
    $region11: #{tpu_custom_call.1} parent=1 // pred_check_branch
      %36 = sbr.rel (0) target = $region13
    $region12: #{tpu_custom_call.1} parent=1 // pred_region
      %s38 = ssub.s32 36864, 36864
      %39 = vsyncadd [#allocation6], %s38
      %s40 = sshll.u32 [#allocation7], 4
      %s41 = int_to_ptr.vmem [resolvable:$true] %s40
      %46 = dma.hbm_to_vmem [thread:$0]  %s2, 36864, %s41, [#allocation6], 1152, 1152, 72
    $region13: #{tpu_custom_call.1} parent=1 // pred_fallthru
      _
    // Predicated region
    $region14: #{tpu_custom_call.1} parent=1 // pred_check
      _
    $region15: #{tpu_custom_call.1} parent=1 // pred_check_branch
      %48 = sbr.rel (0) target = $region17
    $region16: #{tpu_custom_call.1} parent=1 // pred_region
      %s50 = ssub.s32 4096, 4096
      %51 = vsyncadd [#allocation9], %s50
      %s52 = sshll.u32 [#allocation8], 4
      %s53 = int_to_ptr.vmem [resolvable:$true] %s52
      %58 = dma.hbm_to_vmem [thread:$0]  %s3, 4096, %s53, [#allocation9], 512, 512, 32
    $region17: #{tpu_custom_call.1} parent=1 // pred_fallthru
      _
    // Predicated region
    $region18: #{tpu_custom_call.1} parent=1 // pred_check
      _
    $region19: #{tpu_custom_call.1} parent=1 // pred_check_branch
      %60 = sbr.rel (0) target = $region21
    $region20: #{tpu_custom_call.1} parent=1 // pred_region
      %61 = dma.done [#allocation3], 128
    $region21: #{tpu_custom_call.1} parent=1 // pred_fallthru
      _
    // Predicated region
    $region22: #{tpu_custom_call.1} parent=1 // pred_check
      _
    $region23: #{tpu_custom_call.1} parent=1 // pred_check_branch
      %63 = sbr.rel (0) target = $region25
    $region24: #{tpu_custom_call.1} parent=1 // pred_region
      %64 = dma.done [#allocation6], 11520
    $region25: #{tpu_custom_call.1} parent=1 // pred_fallthru
      _
    // Predicated region
    $region26: #{tpu_custom_call.1} parent=1 // pred_check
      _
    $region27: #{tpu_custom_call.1} parent=1 // pred_check_branch
      %66 = sbr.rel (0) target = $region29
    $region28: #{tpu_custom_call.1} parent=1 // pred_region
      %67 = dma.done [#allocation6], 36864
    $region29: #{tpu_custom_call.1} parent=1 // pred_fallthru
      _
    // Predicated region
    $region30: #{tpu_custom_call.1} parent=1 // pred_check
      _
    $region31: #{tpu_custom_call.1} parent=1 // pred_check_branch
      %69 = sbr.rel (0) target = $region33
    $region32: #{tpu_custom_call.1} parent=1 // pred_region
      %70 = dma.done [#allocation9], 4096
    $region33: #{tpu_custom_call.1} parent=1 // pred_fallthru
      _
    %v71 = vld [vmem:[#allocation2] sm:$0xff]
    %v72 = vld [vmem:[#allocation5] sm:$0xff]
    %v73 = vld [vmem:[#allocation5 + $0x8] sm:$0xff]
    %v74 = vld [vmem:[#allocation5 + $0x10] sm:$0xff]
    %v75 = vld [vmem:[#allocation5 + $0x18] sm:$0xff]
    %v76 = vld [vmem:[#allocation5 + $0x20] sm:$0xff]
    %v77 = vld [vmem:[#allocation5 + $0x28] sm:$0xff]
    %v78 = vld [vmem:[#allocation5 + $0x30] sm:$0xff]
    %v79 = vld [vmem:[#allocation5 + $0x38] sm:$0xff]
    %v80 = vld [vmem:[#allocation5 + $0x40] sm:$0xff]
    %v81 = vld [vmem:[#allocation5 + $0x48] sm:$0xff]
    %v82 = vld [vmem:[#allocation5 + $0x50] sm:$0xff]
    %v83 = vld [vmem:[#allocation5 + $0x58] sm:$0xff]
    %v84 = vld [vmem:[#allocation5 + $0x60] sm:$0xff]
    %v85 = vld [vmem:[#allocation5 + $0x68] sm:$0xff]
    %v86 = vld [vmem:[#allocation5 + $0x70] sm:$0xff]
    %v87 = vld [vmem:[#allocation5 + $0x78] sm:$0xff]
    %v88 = vld [vmem:[#allocation5 + $0x80] sm:$0xff]
    %v89 = vld [vmem:[#allocation5 + $0x88] sm:$0xff]
    %v90 = vld [vmem:[#allocation5 + $0x90] sm:$0xff]
    %v91 = vld [vmem:[#allocation5 + $0x98] sm:$0xff]
    %v92 = vld [vmem:[#allocation5 + $0xa0] sm:$0xff]
    %v93 = vld [vmem:[#allocation5 + $0xa8] sm:$0xff]
    %v94 = vld [vmem:[#allocation5 + $0xb0] sm:$0xff]
    %v95 = vld [vmem:[#allocation5 + $0xb8] sm:$0xff]
    %v96 = vld [vmem:[#allocation5 + $0xc0] sm:$0xff]
    %v97 = vld [vmem:[#allocation5 + $0xc8] sm:$0xff]
    %v98 = vld [vmem:[#allocation5 + $0xd0] sm:$0xff]
    %v99 = vld [vmem:[#allocation5 + $0xd8] sm:$0xff]
    %v100 = vld [vmem:[#allocation5 + $0xe0] sm:$0xff]
    %v101 = vld [vmem:[#allocation5 + $0xe8] sm:$0xff]
    %v102 = vld [vmem:[#allocation5 + $0xf0] sm:$0xff]
    %v103 = vld [vmem:[#allocation5 + $0xf8] sm:$0xff]
    %v104 = vld [vmem:[#allocation5 + $0x100] sm:$0xff]
    %v105 = vld [vmem:[#allocation5 + $0x108] sm:$0xff]
    %v106 = vld [vmem:[#allocation5 + $0x110] sm:$0xff]
    %v107 = vld [vmem:[#allocation5 + $0x118] sm:$0xff]
    %v108 = vld [vmem:[#allocation5 + $0x120] sm:$0xff]
    %v109 = vld [vmem:[#allocation5 + $0x128] sm:$0xff]
    %v110 = vld [vmem:[#allocation5 + $0x130] sm:$0xff]
    %v111 = vld [vmem:[#allocation5 + $0x138] sm:$0xff]
    %v112 = vld [vmem:[#allocation5 + $0x140] sm:$0xff]
    %v113 = vld [vmem:[#allocation5 + $0x148] sm:$0xff]
    %v114 = vld [vmem:[#allocation5 + $0x150] sm:$0xff]
    %v115 = vld [vmem:[#allocation5 + $0x158] sm:$0xff]
    %v116 = vld [vmem:[#allocation5 + $0x160] sm:$0xff]
    %v117 = vld [vmem:[#allocation5 + $0x168] sm:$0xff]
    %v118 = vld [vmem:[#allocation5 + $0x170] sm:$0xff]
    %v119 = vld [vmem:[#allocation5 + $0x178] sm:$0xff]
    %v120 = vld [vmem:[#allocation5 + $0x180] sm:$0xff]
    %v121 = vld [vmem:[#allocation5 + $0x188] sm:$0xff]
    %v122 = vld [vmem:[#allocation5 + $0x190] sm:$0xff]
    %v123 = vld [vmem:[#allocation5 + $0x198] sm:$0xff]
    %v124 = vld [vmem:[#allocation5 + $0x1a0] sm:$0xff]
    %v125 = vld [vmem:[#allocation5 + $0x1a8] sm:$0xff]
    %v126 = vld [vmem:[#allocation5 + $0x1b0] sm:$0xff]
    %v127 = vld [vmem:[#allocation5 + $0x1b8] sm:$0xff]
    %v128 = vld [vmem:[#allocation5 + $0x1c0] sm:$0xff]
    %v129 = vld [vmem:[#allocation5 + $0x1c8] sm:$0xff]
    %v130 = vld [vmem:[#allocation5 + $0x1d0] sm:$0xff]
    %v131 = vld [vmem:[#allocation5 + $0x1d8] sm:$0xff]
    %v132 = vld [vmem:[#allocation5 + $0x1e0] sm:$0xff]
    %v133 = vld [vmem:[#allocation5 + $0x1e8] sm:$0xff]
    %v134 = vld [vmem:[#allocation5 + $0x1f0] sm:$0xff]
    %v135 = vld [vmem:[#allocation5 + $0x1f8] sm:$0xff]
    %v136 = vld [vmem:[#allocation5 + $0x200] sm:$0xff]
    %v137 = vld [vmem:[#allocation5 + $0x208] sm:$0xff]
    %v138 = vld [vmem:[#allocation5 + $0x210] sm:$0xff]
    %v139 = vld [vmem:[#allocation5 + $0x218] sm:$0xff]
    %v140 = vld [vmem:[#allocation5 + $0x220] sm:$0xff]
    %v141 = vld [vmem:[#allocation5 + $0x228] sm:$0xff]
    %v142 = vld [vmem:[#allocation5 + $0x230] sm:$0xff]
    %v143 = vld [vmem:[#allocation5 + $0x238] sm:$0xff]
    %v144 = vld [vmem:[#allocation5 + $0x240] sm:$0xff]
    %v145 = vld [vmem:[#allocation5 + $0x248] sm:$0xff]
    %v146 = vld [vmem:[#allocation5 + $0x250] sm:$0xff]
    %v147 = vld [vmem:[#allocation5 + $0x258] sm:$0xff]
    %v148 = vld [vmem:[#allocation5 + $0x260] sm:$0xff]
    %v149 = vld [vmem:[#allocation5 + $0x268] sm:$0xff]
    %v150 = vld [vmem:[#allocation5 + $0x270] sm:$0xff]
    %v151 = vld [vmem:[#allocation5 + $0x278] sm:$0xff]
    %s152 = scalar_lea.vmem [#allocation5], 640
    %v153 = vld [vmem:[%s152] ss:$8 sm:$0xf]
    %v154 = vld [vmem:[%s152] ss:$8 sm:$0xf0]
    %v155 = vor.u32 %v153, %v154
    %s156 = scalar_lea.vmem [#allocation5], 704
    %v157 = vld [vmem:[%s156] ss:$8 sm:$0x3]
    %s158 = scalar_lea.vmem [#allocation5], 641
    %v159 = vld [vmem:[%s158] ss:$8 sm:$0x3]
    %s160 = scalar_lea.vmem [#allocation5], 642
    %v161 = vld [vmem:[%s160] ss:$8 sm:$0x3]
    %v162 = vld [vmem:[#allocation5 + $0x283] ss:$0 sm:$0xff]
    %v163 = vld [vmem:[#allocation5 + $0x284] ss:$0 sm:$0xff]
    %s164 = scalar_lea.vmem [#allocation5], 645
    %v165 = vld [vmem:[%s164] ss:$8 sm:$0x7]
    %v168 = vlaneseq
    %v169 = vshrl.u32 %v168, 7
    %v170 = vsub.s32 0, %v169
    %v171 = vrot.slane %v155, %v170
    %v172 = vlaneseq
    %v173 = vshrl.u32 %v172, 7
    %v174 = vsub.s32 1, %v173
    %v175 = vrot.slane %v155, %v174
    %v176 = vlaneseq
    %v177 = vshrl.u32 %v176, 7
    %v178 = vsub.s32 2, %v177
    %v179 = vrot.slane %v155, %v178
    %v180 = vlaneseq
    %v181 = vshrl.u32 %v180, 7
    %v182 = vsub.s32 3, %v181
    %v183 = vrot.slane %v155, %v182
    %v184 = vlaneseq
    %v185 = vshrl.u32 %v184, 7
    %v186 = vsub.s32 4, %v185
    %v187 = vrot.slane %v155, %v186
    %v188 = vlaneseq
    %v189 = vshrl.u32 %v188, 7
    %v190 = vsub.s32 5, %v189
    %v191 = vrot.slane %v155, %v190
    %v192 = vlaneseq
    %v193 = vshrl.u32 %v192, 7
    %v194 = vsub.s32 6, %v193
    %v195 = vrot.slane %v155, %v194
    %v196 = vlaneseq
    %v197 = vshrl.u32 %v196, 7
    %v198 = vsub.s32 7, %v197
    %v199 = vrot.slane %v155, %v198
    %v200 = vlaneseq
    %v201 = vshrl.u32 %v200, 7
    %v202 = vsub.s32 0, %v201
    %v203 = vrot.slane %v157, %v202
    %v204 = vlaneseq
    %v205 = vshrl.u32 %v204, 7
    %v206 = vsub.s32 1, %v205
    %v207 = vrot.slane %v157, %v206
    %vm218 = vcmask 523264
    %v220 = vsel %vm218, %v71, 0
    %222 = vmatprep.subr.mxu0 0.0
    %223 = vmatpush1.msra.mxu0 0.0
    %224 = vmatprep.subr.mxu0 0.0
    %225 = vmatpush1.msra.mxu0 0.0
    %226 = vmatprep.subr.mxu0 0.0
    %227 = vmatpush1.msra.mxu0 0.0
    %228 = vmatprep.subr.mxu0 0.0
    %229 = vmatpush1.msra.mxu0 0.0
    %230 = vmatprep.subr.mxu0 0.0
    %231 = vmatpush1.msra.mxu0 0.0
    %232 = vmatprep.subr.mxu0 0.0
    %233 = vmatpush1.msra.mxu0 0.0
    %234 = vmatprep.subr.mxu0 0.0
    %235 = vmatpush1.msra.mxu0 0.0
    %236 = vmatprep.subr.mxu0 0.0
    %237 = vmatpush1.msra.mxu0 0.0
    %238 = vmatprep.subr.mxu0 %v143
    %239 = vmatpush1.msra.mxu0 %v142
    %240 = vmatprep.subr.mxu0 %v133
    %241 = vmatpush1.msra.mxu0 %v132
    %242 = vmatprep.subr.mxu0 %v123
    %243 = vmatpush1.msra.mxu0 %v122
    %244 = vmatprep.subr.mxu0 %v113
    %245 = vmatpush1.msra.mxu0 %v112
    %246 = vmatprep.subr.mxu0 %v103
    %247 = vmatpush1.msra.mxu0 %v102
    %248 = vmatprep.subr.mxu0 %v93
    %249 = vmatpush1.msra.mxu0 %v92
    %250 = vmatprep.subr.mxu0 %v83
    %251 = vmatpush1.msra.mxu0 %v82
    %252 = vmatprep.subr.mxu0 %v73
    %253 = vmatpush1.msra.mxu0 %v72
    %254 = vmatprep.subr.mxu0 0.0
    %255 = vmatpush2.msra.mxu0 0.0
    %256 = vmatprep.subr.mxu0 0.0
    %257 = vmatpush2.msra.mxu0 0.0
    %258 = vmatprep.subr.mxu0 0.0
    %259 = vmatpush2.msra.mxu0 0.0
    %260 = vmatprep.subr.mxu0 0.0
    %261 = vmatpush2.msra.mxu0 0.0
    %262 = vmatprep.subr.mxu0 0.0
    %263 = vmatpush2.msra.mxu0 0.0
    %264 = vmatprep.subr.mxu0 0.0
    %265 = vmatpush2.msra.mxu0 0.0
    %266 = vmatprep.subr.mxu0 0.0
    %267 = vmatpush2.msra.mxu0 0.0
    %268 = vmatprep.subr.mxu0 0.0
    %269 = vmatpush2.msra.mxu0 0.0
    %270 = vmatprep.subr.mxu0 0.0
    %271 = vmatpush2.msra.mxu0 0.0
    %272 = vmatprep.subr.mxu0 0.0
    %273 = vmatpush2.msra.mxu0 0.0
    %274 = vmatprep.subr.mxu0 0.0
    %275 = vmatpush2.msra.mxu0 0.0
    %276 = vmatprep.subr.mxu0 0.0
    %277 = vmatpush2.msra.mxu0 0.0
    %278 = vmatprep.subr.mxu0 0.0
    %279 = vmatpush2.msra.mxu0 0.0
    %280 = vmatprep.subr.mxu0 0.0
    %281 = vmatpush2.msra.mxu0 0.0
    %282 = vmatprep.subr.mxu0 0.0
    %283 = vmatpush2.msra.mxu0 0.0
    %284 = vmatprep.subr.mxu0 0.0
    %285 = vmatpush2.msra.mxu0 0.0
    %286 = vmatprep.mubr.f32.mxu0 0.0
    %287 = vmatmul.mubr.f32.gmra.mxu0 %v220
    %v288 = vpop.f32.mrf.mxu0
    %v289 = vadd.f32 %v171, %v288
    %v290 = vpop.f32.mrf.mxu0
    %v291 = vadd.f32 %v175, %v290
    %292 = vdwg.mxu0
    %293 = vmatprep.subr.mxu0 0.0
    %294 = vmatpush1.msra.mxu0 0.0
    %295 = vmatprep.subr.mxu0 0.0
    %296 = vmatpush1.msra.mxu0 0.0
    %297 = vmatprep.subr.mxu0 0.0
    %298 = vmatpush1.msra.mxu0 0.0
    %299 = vmatprep.subr.mxu0 0.0
    %300 = vmatpush1.msra.mxu0 0.0
    %301 = vmatprep.subr.mxu0 0.0
    %302 = vmatpush1.msra.mxu0 0.0
    %303 = vmatprep.subr.mxu0 0.0
    %304 = vmatpush1.msra.mxu0 0.0
    %305 = vmatprep.subr.mxu0 0.0
    %306 = vmatpush1.msra.mxu0 0.0
    %307 = vmatprep.subr.mxu0 0.0
    %308 = vmatpush1.msra.mxu0 0.0
    %309 = vmatprep.subr.mxu0 %v145
    %310 = vmatpush1.msra.mxu0 %v144
    %311 = vmatprep.subr.mxu0 %v135
    %312 = vmatpush1.msra.mxu0 %v134
    %313 = vmatprep.subr.mxu0 %v125
    %314 = vmatpush1.msra.mxu0 %v124
    %315 = vmatprep.subr.mxu0 %v115
    %316 = vmatpush1.msra.mxu0 %v114
    %317 = vmatprep.subr.mxu0 %v105
    %318 = vmatpush1.msra.mxu0 %v104
    %319 = vmatprep.subr.mxu0 %v95
    %320 = vmatpush1.msra.mxu0 %v94
    %321 = vmatprep.subr.mxu0 %v85
    %322 = vmatpush1.msra.mxu0 %v84
    %323 = vmatprep.subr.mxu0 %v75
    %324 = vmatpush1.msra.mxu0 %v74
    %325 = vmatprep.subr.mxu0 0.0
    %326 = vmatpush2.msra.mxu0 0.0
    %327 = vmatprep.subr.mxu0 0.0
    %328 = vmatpush2.msra.mxu0 0.0
    %329 = vmatprep.subr.mxu0 0.0
    %330 = vmatpush2.msra.mxu0 0.0
    %331 = vmatprep.subr.mxu0 0.0
    %332 = vmatpush2.msra.mxu0 0.0
    %333 = vmatprep.subr.mxu0 0.0
    %334 = vmatpush2.msra.mxu0 0.0
    %335 = vmatprep.subr.mxu0 0.0
    %336 = vmatpush2.msra.mxu0 0.0
    %337 = vmatprep.subr.mxu0 0.0
    %338 = vmatpush2.msra.mxu0 0.0
    %339 = vmatprep.subr.mxu0 0.0
    %340 = vmatpush2.msra.mxu0 0.0
    %341 = vmatprep.subr.mxu0 0.0
    %342 = vmatpush2.msra.mxu0 0.0
    %343 = vmatprep.subr.mxu0 0.0
    %344 = vmatpush2.msra.mxu0 0.0
    %345 = vmatprep.subr.mxu0 0.0
    %346 = vmatpush2.msra.mxu0 0.0
    %347 = vmatprep.subr.mxu0 0.0
    %348 = vmatpush2.msra.mxu0 0.0
    %349 = vmatprep.subr.mxu0 0.0
    %350 = vmatpush2.msra.mxu0 0.0
    %351 = vmatprep.subr.mxu0 0.0
    %352 = vmatpush2.msra.mxu0 0.0
    %353 = vmatprep.subr.mxu0 0.0
    %354 = vmatpush2.msra.mxu0 0.0
    %355 = vmatprep.subr.mxu0 0.0
    %356 = vmatpush2.msra.mxu0 0.0
    %357 = vmatprep.mubr.f32.mxu0 0.0
    %358 = vmatmul.mubr.f32.gmra.mxu0 %v220
    %v359 = vpop.f32.mrf.mxu0
    %v360 = vadd.f32 %v179, %v359
    %v361 = vpop.f32.mrf.mxu0
    %v362 = vadd.f32 %v183, %v361
    %363 = vdwg.mxu0
    %364 = vmatprep.subr.mxu0 0.0
    %365 = vmatpush1.msra.mxu0 0.0
    %366 = vmatprep.subr.mxu0 0.0
    %367 = vmatpush1.msra.mxu0 0.0
    %368 = vmatprep.subr.mxu0 0.0
    %369 = vmatpush1.msra.mxu0 0.0
    %370 = vmatprep.subr.mxu0 0.0
    %371 = vmatpush1.msra.mxu0 0.0
    %372 = vmatprep.subr.mxu0 0.0
    %373 = vmatpush1.msra.mxu0 0.0
    %374 = vmatprep.subr.mxu0 0.0
    %375 = vmatpush1.msra.mxu0 0.0
    %376 = vmatprep.subr.mxu0 0.0
    %377 = vmatpush1.msra.mxu0 0.0
    %378 = vmatprep.subr.mxu0 0.0
    %379 = vmatpush1.msra.mxu0 0.0
    %380 = vmatprep.subr.mxu0 %v147
    %381 = vmatpush1.msra.mxu0 %v146
    %382 = vmatprep.subr.mxu0 %v137
    %383 = vmatpush1.msra.mxu0 %v136
    %384 = vmatprep.subr.mxu0 %v127
    %385 = vmatpush1.msra.mxu0 %v126
    %386 = vmatprep.subr.mxu0 %v117
    %387 = vmatpush1.msra.mxu0 %v116
    %388 = vmatprep.subr.mxu0 %v107
    %389 = vmatpush1.msra.mxu0 %v106
    %390 = vmatprep.subr.mxu0 %v97
    %391 = vmatpush1.msra.mxu0 %v96
    %392 = vmatprep.subr.mxu0 %v87
    %393 = vmatpush1.msra.mxu0 %v86
    %394 = vmatprep.subr.mxu0 %v77
    %395 = vmatpush1.msra.mxu0 %v76
    %396 = vmatprep.subr.mxu0 0.0
    %397 = vmatpush2.msra.mxu0 0.0
    %398 = vmatprep.subr.mxu0 0.0
    %399 = vmatpush2.msra.mxu0 0.0
    %400 = vmatprep.subr.mxu0 0.0
    %401 = vmatpush2.msra.mxu0 0.0
    %402 = vmatprep.subr.mxu0 0.0
    %403 = vmatpush2.msra.mxu0 0.0
    %404 = vmatprep.subr.mxu0 0.0
    %405 = vmatpush2.msra.mxu0 0.0
    %406 = vmatprep.subr.mxu0 0.0
    %407 = vmatpush2.msra.mxu0 0.0
    %408 = vmatprep.subr.mxu0 0.0
    %409 = vmatpush2.msra.mxu0 0.0
    %410 = vmatprep.subr.mxu0 0.0
    %411 = vmatpush2.msra.mxu0 0.0
    %412 = vmatprep.subr.mxu0 0.0
    %413 = vmatpush2.msra.mxu0 0.0
    %414 = vmatprep.subr.mxu0 0.0
    %415 = vmatpush2.msra.mxu0 0.0
    %416 = vmatprep.subr.mxu0 0.0
    %417 = vmatpush2.msra.mxu0 0.0
    %418 = vmatprep.subr.mxu0 0.0
    %419 = vmatpush2.msra.mxu0 0.0
    %420 = vmatprep.subr.mxu0 0.0
    %421 = vmatpush2.msra.mxu0 0.0
    %422 = vmatprep.subr.mxu0 0.0
    %423 = vmatpush2.msra.mxu0 0.0
    %424 = vmatprep.subr.mxu0 0.0
    %425 = vmatpush2.msra.mxu0 0.0
    %426 = vmatprep.subr.mxu0 0.0
    %427 = vmatpush2.msra.mxu0 0.0
    %428 = vmatprep.mubr.f32.mxu0 0.0
    %429 = vmatmul.mubr.f32.gmra.mxu0 %v220
    %v430 = vpop.f32.mrf.mxu0
    %v431 = vadd.f32 %v187, %v430
    %v432 = vpop.f32.mrf.mxu0
    %v433 = vadd.f32 %v191, %v432
    %434 = vdwg.mxu0
    %435 = vmatprep.subr.mxu0 0.0
    %436 = vmatpush1.msra.mxu0 0.0
    %437 = vmatprep.subr.mxu0 0.0
    %438 = vmatpush1.msra.mxu0 0.0
    %439 = vmatprep.subr.mxu0 0.0
    %440 = vmatpush1.msra.mxu0 0.0
    %441 = vmatprep.subr.mxu0 0.0
    %442 = vmatpush1.msra.mxu0 0.0
    %443 = vmatprep.subr.mxu0 0.0
    %444 = vmatpush1.msra.mxu0 0.0
    %445 = vmatprep.subr.mxu0 0.0
    %446 = vmatpush1.msra.mxu0 0.0
    %447 = vmatprep.subr.mxu0 0.0
    %448 = vmatpush1.msra.mxu0 0.0
    %449 = vmatprep.subr.mxu0 0.0
    %450 = vmatpush1.msra.mxu0 0.0
    %451 = vmatprep.subr.mxu0 %v149
    %452 = vmatpush1.msra.mxu0 %v148
    %453 = vmatprep.subr.mxu0 %v139
    %454 = vmatpush1.msra.mxu0 %v138
    %455 = vmatprep.subr.mxu0 %v129
    %456 = vmatpush1.msra.mxu0 %v128
    %457 = vmatprep.subr.mxu0 %v119
    %458 = vmatpush1.msra.mxu0 %v118
    %459 = vmatprep.subr.mxu0 %v109
    %460 = vmatpush1.msra.mxu0 %v108
    %461 = vmatprep.subr.mxu0 %v99
    %462 = vmatpush1.msra.mxu0 %v98
    %463 = vmatprep.subr.mxu0 %v89
    %464 = vmatpush1.msra.mxu0 %v88
    %465 = vmatprep.subr.mxu0 %v79
    %466 = vmatpush1.msra.mxu0 %v78
    %467 = vmatprep.subr.mxu0 0.0
    %468 = vmatpush2.msra.mxu0 0.0
    %469 = vmatprep.subr.mxu0 0.0
    %470 = vmatpush2.msra.mxu0 0.0
    %471 = vmatprep.subr.mxu0 0.0
    %472 = vmatpush2.msra.mxu0 0.0
    %473 = vmatprep.subr.mxu0 0.0
    %474 = vmatpush2.msra.mxu0 0.0
    %475 = vmatprep.subr.mxu0 0.0
    %476 = vmatpush2.msra.mxu0 0.0
    %477 = vmatprep.subr.mxu0 0.0
    %478 = vmatpush2.msra.mxu0 0.0
    %479 = vmatprep.subr.mxu0 0.0
    %480 = vmatpush2.msra.mxu0 0.0
    %481 = vmatprep.subr.mxu0 0.0
    %482 = vmatpush2.msra.mxu0 0.0
    %483 = vmatprep.subr.mxu0 0.0
    %484 = vmatpush2.msra.mxu0 0.0
    %485 = vmatprep.subr.mxu0 0.0
    %486 = vmatpush2.msra.mxu0 0.0
    %487 = vmatprep.subr.mxu0 0.0
    %488 = vmatpush2.msra.mxu0 0.0
    %489 = vmatprep.subr.mxu0 0.0
    %490 = vmatpush2.msra.mxu0 0.0
    %491 = vmatprep.subr.mxu0 0.0
    %492 = vmatpush2.msra.mxu0 0.0
    %493 = vmatprep.subr.mxu0 0.0
    %494 = vmatpush2.msra.mxu0 0.0
    %495 = vmatprep.subr.mxu0 0.0
    %496 = vmatpush2.msra.mxu0 0.0
    %497 = vmatprep.subr.mxu0 0.0
    %498 = vmatpush2.msra.mxu0 0.0
    %499 = vmatprep.mubr.f32.mxu0 0.0
    %500 = vmatmul.mubr.f32.gmra.mxu0 %v220
    %v501 = vpop.f32.mrf.mxu0
    %v502 = vadd.f32 %v195, %v501
    %v503 = vpop.f32.mrf.mxu0
    %v504 = vadd.f32 %v199, %v503
    %505 = vdwg.mxu0
    %506 = vmatprep.subr.mxu0 0.0
    %507 = vmatpush1.msra.mxu0 0.0
    %508 = vmatprep.subr.mxu0 0.0
    %509 = vmatpush1.msra.mxu0 0.0
    %510 = vmatprep.subr.mxu0 0.0
    %511 = vmatpush1.msra.mxu0 0.0
    %512 = vmatprep.subr.mxu0 0.0
    %513 = vmatpush1.msra.mxu0 0.0
    %514 = vmatprep.subr.mxu0 0.0
    %515 = vmatpush1.msra.mxu0 0.0
    %516 = vmatprep.subr.mxu0 0.0
    %517 = vmatpush1.msra.mxu0 0.0
    %518 = vmatprep.subr.mxu0 0.0
    %519 = vmatpush1.msra.mxu0 0.0
    %520 = vmatprep.subr.mxu0 0.0
    %521 = vmatpush1.msra.mxu0 0.0
    %522 = vmatprep.subr.mxu0 %v151
    %523 = vmatpush1.msra.mxu0 %v150
    %524 = vmatprep.subr.mxu0 %v141
    %525 = vmatpush1.msra.mxu0 %v140
    %526 = vmatprep.subr.mxu0 %v131
    %527 = vmatpush1.msra.mxu0 %v130
    %528 = vmatprep.subr.mxu0 %v121
    %529 = vmatpush1.msra.mxu0 %v120
    %530 = vmatprep.subr.mxu0 %v111
    %531 = vmatpush1.msra.mxu0 %v110
    %532 = vmatprep.subr.mxu0 %v101
    %533 = vmatpush1.msra.mxu0 %v100
    %534 = vmatprep.subr.mxu0 %v91
    %535 = vmatpush1.msra.mxu0 %v90
    %536 = vmatprep.subr.mxu0 %v81
    %537 = vmatpush1.msra.mxu0 %v80
    %538 = vmatprep.subr.mxu0 0.0
    %539 = vmatpush2.msra.mxu0 0.0
    %540 = vmatprep.subr.mxu0 0.0
    %541 = vmatpush2.msra.mxu0 0.0
    %542 = vmatprep.subr.mxu0 0.0
    %543 = vmatpush2.msra.mxu0 0.0
    %544 = vmatprep.subr.mxu0 0.0
    %545 = vmatpush2.msra.mxu0 0.0
    %546 = vmatprep.subr.mxu0 0.0
    %547 = vmatpush2.msra.mxu0 0.0
    %548 = vmatprep.subr.mxu0 0.0
    %549 = vmatpush2.msra.mxu0 0.0
    %550 = vmatprep.subr.mxu0 0.0
    %551 = vmatpush2.msra.mxu0 0.0
    %552 = vmatprep.subr.mxu0 0.0
    %553 = vmatpush2.msra.mxu0 0.0
    %554 = vmatprep.subr.mxu0 0.0
    %555 = vmatpush2.msra.mxu0 0.0
    %556 = vmatprep.subr.mxu0 0.0
    %557 = vmatpush2.msra.mxu0 0.0
    %558 = vmatprep.subr.mxu0 0.0
    %559 = vmatpush2.msra.mxu0 0.0
    %560 = vmatprep.subr.mxu0 0.0
    %561 = vmatpush2.msra.mxu0 0.0
    %562 = vmatprep.subr.mxu0 0.0
    %563 = vmatpush2.msra.mxu0 0.0
    %564 = vmatprep.subr.mxu0 0.0
    %565 = vmatpush2.msra.mxu0 0.0
    %566 = vmatprep.subr.mxu0 0.0
    %567 = vmatpush2.msra.mxu0 0.0
    %568 = vmatprep.subr.mxu0 0.0
    %569 = vmatpush2.msra.mxu0 0.0
    %570 = vmatprep.mubr.f32.mxu0 0.0
    %571 = vmatmul.mubr.f32.gmra.mxu0 %v220
    %v572 = vpop.f32.mrf.mxu0
    %v573 = vadd.f32 %v203, %v572
    %v574 = vpop.f32.mrf.mxu0
    %v575 = vadd.f32 %v207, %v574
    %576 = vdwg.mxu0
    %v577 = vtanh.pop %v289
    %v578 = vtanh.pop %v291
    %v579 = vmul.f32 %v577, 0.0
    %v580 = vmul.f32 %v578, 0.0
    %v581 = vadd.f32 %v579, %v360
    %v582 = vadd.f32 %v580, %v362
    %v585 = vrot.slane %v581, 7
    %v586 = vrot.slane %v582, 7
    %v589 = vmul.f32 %v577, %v585
    %v590 = vmul.f32 %v578, %v586
    %v591 = vadd.f32 %v589, %v360
    %v592 = vadd.f32 %v590, %v362
    %v595 = vrot.slane %v591, 7
    %v596 = vrot.slane %v592, 7
    %v599 = vmul.f32 %v577, %v595
    %v600 = vmul.f32 %v578, %v596
    %v601 = vadd.f32 %v599, %v360
    %v602 = vadd.f32 %v600, %v362
    %v605 = vrot.slane %v601, 7
    %v606 = vrot.slane %v602, 7
    %v609 = vmul.f32 %v577, %v605
    %v610 = vmul.f32 %v578, %v606
    %v611 = vadd.f32 %v609, %v360
    %v612 = vadd.f32 %v610, %v362
    %v615 = vrot.slane %v611, 7
    %v616 = vrot.slane %v612, 7
    %v619 = vmul.f32 %v577, %v615
    %v620 = vmul.f32 %v578, %v616
    %v621 = vadd.f32 %v619, %v360
    %v622 = vadd.f32 %v620, %v362
    %v625 = vrot.slane %v621, 7
    %v626 = vrot.slane %v622, 7
    %v629 = vmul.f32 %v577, %v625
    %v630 = vmul.f32 %v578, %v626
    %v631 = vadd.f32 %v629, %v360
    %v632 = vadd.f32 %v630, %v362
    %v635 = vrot.slane %v631, 7
    %v636 = vrot.slane %v632, 7
    %v639 = vmul.f32 %v577, %v635
    %v640 = vmul.f32 %v578, %v636
    %v641 = vadd.f32 %v639, %v360
    %v642 = vadd.f32 %v640, %v362
    %v645 = vrot.slane %v641, 7
    %v646 = vrot.slane %v642, 7
    %v649 = vmul.f32 %v577, %v645
    %v650 = vmul.f32 %v578, %v646
    %v651 = vadd.f32 %v649, %v360
    %v652 = vadd.f32 %v650, %v362
    %vm653 = vcmask 1040384
    %v654 = vsel %vm653, %v581, %v591
    %v655 = vsel %vm653, %v582, %v592
    %vm656 = vcmask 1041408
    %v657 = vsel %vm656, %v654, %v601
    %v658 = vsel %vm656, %v655, %v602
    %vm659 = vcmask 1042432
    %v660 = vsel %vm659, %v657, %v611
    %v661 = vsel %vm659, %v658, %v612
    %vm662 = vcmask 1043456
    %v663 = vsel %vm662, %v660, %v621
    %v664 = vsel %vm662, %v661, %v622
    %vm665 = vcmask 1044480
    %v666 = vsel %vm665, %v663, %v631
    %v667 = vsel %vm665, %v664, %v632
    %vm668 = vcmask 1045504
    %v669 = vsel %vm668, %v666, %v641
    %v670 = vsel %vm668, %v667, %v642
    %vm671 = vcmask 1046528
    %v672 = vsel %vm671, %v669, %v651
    %v673 = vsel %vm671, %v670, %v652
    %v674 = vld [vmem:[#allocation7] sm:$0xff]
    %v675 = vld [vmem:[#allocation7 + $0x8] sm:$0xff]
    %v676 = vld [vmem:[#allocation7 + $0x10] sm:$0xff]
    %v677 = vld [vmem:[#allocation7 + $0x18] sm:$0xff]
    %v678 = vld [vmem:[#allocation7 + $0x48] sm:$0xff]
    %v679 = vld [vmem:[#allocation7 + $0x50] sm:$0xff]
    %v680 = vld [vmem:[#allocation7 + $0x58] sm:$0xff]
    %v681 = vld [vmem:[#allocation7 + $0x60] sm:$0xff]
    %v682 = vld [vmem:[#allocation7 + $0x90] sm:$0xff]
    %v683 = vld [vmem:[#allocation7 + $0x98] sm:$0xff]
    %v684 = vld [vmem:[#allocation7 + $0xa0] sm:$0xff]
    %v685 = vld [vmem:[#allocation7 + $0xa8] sm:$0xff]
    %v686 = vld [vmem:[#allocation7 + $0xd8] sm:$0xff]
    %v687 = vld [vmem:[#allocation7 + $0xe0] sm:$0xff]
    %v688 = vld [vmem:[#allocation7 + $0xe8] sm:$0xff]
    %v689 = vld [vmem:[#allocation7 + $0xf0] sm:$0xff]
    %v690 = vld [vmem:[#allocation7 + $0x120] sm:$0xff]
    %v691 = vld [vmem:[#allocation7 + $0x128] sm:$0xff]
    %v692 = vld [vmem:[#allocation7 + $0x130] sm:$0xff]
    %v693 = vld [vmem:[#allocation7 + $0x138] sm:$0xff]
    %v694 = vld [vmem:[#allocation7 + $0x168] sm:$0xff]
    %v695 = vld [vmem:[#allocation7 + $0x170] sm:$0xff]
    %v696 = vld [vmem:[#allocation7 + $0x178] sm:$0xff]
    %v697 = vld [vmem:[#allocation7 + $0x180] sm:$0xff]
    %v698 = vld [vmem:[#allocation7 + $0x1b0] sm:$0xff]
    %v699 = vld [vmem:[#allocation7 + $0x1b8] sm:$0xff]
    %v700 = vld [vmem:[#allocation7 + $0x1c0] sm:$0xff]
    %v701 = vld [vmem:[#allocation7 + $0x1c8] sm:$0xff]
    %v702 = vld [vmem:[#allocation7 + $0x1f8] sm:$0xff]
    %v703 = vld [vmem:[#allocation7 + $0x200] sm:$0xff]
    %v704 = vld [vmem:[#allocation7 + $0x208] sm:$0xff]
    %v705 = vld [vmem:[#allocation7 + $0x210] sm:$0xff]
    %v706 = vld [vmem:[#allocation7 + $0x240] sm:$0xff]
    %v707 = vld [vmem:[#allocation7 + $0x248] sm:$0xff]
    %v708 = vld [vmem:[#allocation7 + $0x250] sm:$0xff]
    %v709 = vld [vmem:[#allocation7 + $0x258] sm:$0xff]
    %v710 = vld [vmem:[#allocation7 + $0x288] sm:$0xff]
    %v711 = vld [vmem:[#allocation7 + $0x290] sm:$0xff]
    %v712 = vld [vmem:[#allocation7 + $0x298] sm:$0xff]
    %v713 = vld [vmem:[#allocation7 + $0x2a0] sm:$0xff]
    %v714 = vld [vmem:[#allocation7 + $0x2d0] sm:$0xff]
    %v715 = vld [vmem:[#allocation7 + $0x2d8] sm:$0xff]
    %v716 = vld [vmem:[#allocation7 + $0x2e0] sm:$0xff]
    %v717 = vld [vmem:[#allocation7 + $0x2e8] sm:$0xff]
    %v718 = vld [vmem:[#allocation7 + $0x318] sm:$0xff]
    %v719 = vld [vmem:[#allocation7 + $0x320] sm:$0xff]
    %v720 = vld [vmem:[#allocation7 + $0x328] sm:$0xff]
    %v721 = vld [vmem:[#allocation7 + $0x330] sm:$0xff]
    %v722 = vld [vmem:[#allocation7 + $0x360] sm:$0xff]
    %v723 = vld [vmem:[#allocation7 + $0x368] sm:$0xff]
    %v724 = vld [vmem:[#allocation7 + $0x370] sm:$0xff]
    %v725 = vld [vmem:[#allocation7 + $0x378] sm:$0xff]
    %v726 = vld [vmem:[#allocation7 + $0x3a8] sm:$0xff]
    %v727 = vld [vmem:[#allocation7 + $0x3b0] sm:$0xff]
    %v728 = vld [vmem:[#allocation7 + $0x3b8] sm:$0xff]
    %v729 = vld [vmem:[#allocation7 + $0x3c0] sm:$0xff]
    %v730 = vld [vmem:[#allocation7 + $0x3f0] sm:$0xff]
    %v731 = vld [vmem:[#allocation7 + $0x3f8] sm:$0xff]
    %v732 = vld [vmem:[#allocation7 + $0x400] sm:$0xff]
    %v733 = vld [vmem:[#allocation7 + $0x408] sm:$0xff]
    %v734 = vld [vmem:[#allocation7 + $0x438] sm:$0xff]
    %v735 = vld [vmem:[#allocation7 + $0x440] sm:$0xff]
    %v736 = vld [vmem:[#allocation7 + $0x448] sm:$0xff]
    %v737 = vld [vmem:[#allocation7 + $0x450] sm:$0xff]
    %v738 = vld [vmem:[#allocation7 + $0x480] sm:$0xff]
    %v739 = vld [vmem:[#allocation7 + $0x488] sm:$0xff]
    %v740 = vld [vmem:[#allocation7 + $0x490] sm:$0xff]
    %v741 = vld [vmem:[#allocation7 + $0x498] sm:$0xff]
    %v742 = vld [vmem:[#allocation7 + $0x4c8] sm:$0xff]
    %v743 = vld [vmem:[#allocation7 + $0x4d0] sm:$0xff]
    %v744 = vld [vmem:[#allocation7 + $0x4d8] sm:$0xff]
    %v745 = vld [vmem:[#allocation7 + $0x4e0] sm:$0xff]
    %v746 = vld [vmem:[#allocation7 + $0x510] sm:$0xff]
    %v747 = vld [vmem:[#allocation7 + $0x518] sm:$0xff]
    %v748 = vld [vmem:[#allocation7 + $0x520] sm:$0xff]
    %v749 = vld [vmem:[#allocation7 + $0x528] sm:$0xff]
    %v750 = vld [vmem:[#allocation7 + $0x558] sm:$0xff]
    %v751 = vld [vmem:[#allocation7 + $0x560] sm:$0xff]
    %v752 = vld [vmem:[#allocation7 + $0x568] sm:$0xff]
    %v753 = vld [vmem:[#allocation7 + $0x570] sm:$0xff]
    %v754 = vld [vmem:[#allocation7 + $0x5a0] sm:$0xff]
    %v755 = vld [vmem:[#allocation7 + $0x5a8] sm:$0xff]
    %v756 = vld [vmem:[#allocation7 + $0x5b0] sm:$0xff]
    %v757 = vld [vmem:[#allocation7 + $0x5b8] sm:$0xff]
    %v758 = vld [vmem:[#allocation7 + $0x5e8] sm:$0xff]
    %v759 = vld [vmem:[#allocation7 + $0x5f0] sm:$0xff]
    %v760 = vld [vmem:[#allocation7 + $0x5f8] sm:$0xff]
    %v761 = vld [vmem:[#allocation7 + $0x600] sm:$0xff]
    %v762 = vld [vmem:[#allocation7 + $0x630] sm:$0xff]
    %v763 = vld [vmem:[#allocation7 + $0x638] sm:$0xff]
    %v764 = vld [vmem:[#allocation7 + $0x640] sm:$0xff]
    %v765 = vld [vmem:[#allocation7 + $0x648] sm:$0xff]
    %v766 = vld [vmem:[#allocation7 + $0x678] sm:$0xff]
    %v767 = vld [vmem:[#allocation7 + $0x680] sm:$0xff]
    %v768 = vld [vmem:[#allocation7 + $0x688] sm:$0xff]
    %v769 = vld [vmem:[#allocation7 + $0x690] sm:$0xff]
    %v770 = vld [vmem:[#allocation7 + $0x6c0] sm:$0xff]
    %v771 = vld [vmem:[#allocation7 + $0x6c8] sm:$0xff]
    %v772 = vld [vmem:[#allocation7 + $0x6d0] sm:$0xff]
    %v773 = vld [vmem:[#allocation7 + $0x6d8] sm:$0xff]
    %v774 = vld [vmem:[#allocation7 + $0x708] sm:$0xff]
    %v775 = vld [vmem:[#allocation7 + $0x710] sm:$0xff]
    %v776 = vld [vmem:[#allocation7 + $0x718] sm:$0xff]
    %v777 = vld [vmem:[#allocation7 + $0x720] sm:$0xff]
    %v778 = vld [vmem:[#allocation7 + $0x750] sm:$0xff]
    %v779 = vld [vmem:[#allocation7 + $0x758] sm:$0xff]
    %v780 = vld [vmem:[#allocation7 + $0x760] sm:$0xff]
    %v781 = vld [vmem:[#allocation7 + $0x768] sm:$0xff]
    %v782 = vld [vmem:[#allocation7 + $0x798] sm:$0xff]
    %v783 = vld [vmem:[#allocation7 + $0x7a0] sm:$0xff]
    %v784 = vld [vmem:[#allocation7 + $0x7a8] sm:$0xff]
    %v785 = vld [vmem:[#allocation7 + $0x7b0] sm:$0xff]
    %v786 = vld [vmem:[#allocation7 + $0x7e0] sm:$0xff]
    %v787 = vld [vmem:[#allocation7 + $0x7e8] sm:$0xff]
    %v788 = vld [vmem:[#allocation7 + $0x7f0] sm:$0xff]
    %v789 = vld [vmem:[#allocation7 + $0x7f8] sm:$0xff]
    %v790 = vld [vmem:[#allocation7 + $0x828] sm:$0xff]
    %v791 = vld [vmem:[#allocation7 + $0x830] sm:$0xff]
    %v792 = vld [vmem:[#allocation7 + $0x838] sm:$0xff]
    %v793 = vld [vmem:[#allocation7 + $0x840] sm:$0xff]
    %v794 = vld [vmem:[#allocation7 + $0x870] sm:$0xff]
    %v795 = vld [vmem:[#allocation7 + $0x878] sm:$0xff]
    %v796 = vld [vmem:[#allocation7 + $0x880] sm:$0xff]
    %v797 = vld [vmem:[#allocation7 + $0x888] sm:$0xff]
    %v798 = vld [vmem:[#allocation7 + $0x8b8] sm:$0xff]
    %v799 = vld [vmem:[#allocation7 + $0x8c0] sm:$0xff]
    %v800 = vld [vmem:[#allocation7 + $0x8c8] sm:$0xff]
    %v801 = vld [vmem:[#allocation7 + $0x8d0] sm:$0xff]
    %802 = vmatprep.subr.mxu0 %v735
    %803 = vmatpush1.msra.mxu0 %v734
    %804 = vmatprep.subr.mxu0 %v731
    %805 = vmatpush1.msra.mxu0 %v730
    %806 = vmatprep.subr.mxu0 %v727
    %807 = vmatpush1.msra.mxu0 %v726
    %808 = vmatprep.subr.mxu0 %v723
    %809 = vmatpush1.msra.mxu0 %v722
    %810 = vmatprep.subr.mxu0 %v719
    %811 = vmatpush1.msra.mxu0 %v718
    %812 = vmatprep.subr.mxu0 %v715
    %813 = vmatpush1.msra.mxu0 %v714
    %814 = vmatprep.subr.mxu0 %v711
    %815 = vmatpush1.msra.mxu0 %v710
    %816 = vmatprep.subr.mxu0 %v707
    %817 = vmatpush1.msra.mxu0 %v706
    %818 = vmatprep.subr.mxu0 %v703
    %819 = vmatpush1.msra.mxu0 %v702
    %820 = vmatprep.subr.mxu0 %v699
    %821 = vmatpush1.msra.mxu0 %v698
    %822 = vmatprep.subr.mxu0 %v695
    %823 = vmatpush1.msra.mxu0 %v694
    %824 = vmatprep.subr.mxu0 %v691
    %825 = vmatpush1.msra.mxu0 %v690
    %826 = vmatprep.subr.mxu0 %v687
    %827 = vmatpush1.msra.mxu0 %v686
    %828 = vmatprep.subr.mxu0 %v683
    %829 = vmatpush1.msra.mxu0 %v682
    %830 = vmatprep.subr.mxu0 %v679
    %831 = vmatpush1.msra.mxu0 %v678
    %832 = vmatprep.subr.mxu0 %v675
    %833 = vmatpush1.msra.mxu0 %v674
    %834 = vmatprep.subr.mxu0 %v799
    %835 = vmatpush2.msra.mxu0 %v798
    %836 = vmatprep.subr.mxu0 %v795
    %837 = vmatpush2.msra.mxu0 %v794
    %838 = vmatprep.subr.mxu0 %v791
    %839 = vmatpush2.msra.mxu0 %v790
    %840 = vmatprep.subr.mxu0 %v787
    %841 = vmatpush2.msra.mxu0 %v786
    %842 = vmatprep.subr.mxu0 %v783
    %843 = vmatpush2.msra.mxu0 %v782
    %844 = vmatprep.subr.mxu0 %v779
    %845 = vmatpush2.msra.mxu0 %v778
    %846 = vmatprep.subr.mxu0 %v775
    %847 = vmatpush2.msra.mxu0 %v774
    %848 = vmatprep.subr.mxu0 %v771
    %849 = vmatpush2.msra.mxu0 %v770
    %850 = vmatprep.subr.mxu0 %v767
    %851 = vmatpush2.msra.mxu0 %v766
    %852 = vmatprep.subr.mxu0 %v763
    %853 = vmatpush2.msra.mxu0 %v762
    %854 = vmatprep.subr.mxu0 %v759
    %855 = vmatpush2.msra.mxu0 %v758
    %856 = vmatprep.subr.mxu0 %v755
    %857 = vmatpush2.msra.mxu0 %v754
    %858 = vmatprep.subr.mxu0 %v751
    %859 = vmatpush2.msra.mxu0 %v750
    %860 = vmatprep.subr.mxu0 %v747
    %861 = vmatpush2.msra.mxu0 %v746
    %862 = vmatprep.subr.mxu0 %v743
    %863 = vmatpush2.msra.mxu0 %v742
    %864 = vmatprep.subr.mxu0 %v739
    %865 = vmatpush2.msra.mxu0 %v738
    %866 = vmatprep.mubr.f32.mxu0 %v673
    %867 = vmatmul.mubr.f32.gmra.mxu0 %v672
    %v868 = vpop.f32.mrf.mxu0
    %v869 = vadd.f32 0.0, %v868
    %v870 = vpop.f32.mrf.mxu0
    %v871 = vadd.f32 0.0, %v870
    %872 = vdwg.mxu0
    %873 = vmatprep.subr.mxu0 %v737
    %874 = vmatpush1.msra.mxu0 %v736
    %875 = vmatprep.subr.mxu0 %v733
    %876 = vmatpush1.msra.mxu0 %v732
    %877 = vmatprep.subr.mxu0 %v729
    %878 = vmatpush1.msra.mxu0 %v728
    %879 = vmatprep.subr.mxu0 %v725
    %880 = vmatpush1.msra.mxu0 %v724
    %881 = vmatprep.subr.mxu0 %v721
    %882 = vmatpush1.msra.mxu0 %v720
    %883 = vmatprep.subr.mxu0 %v717
    %884 = vmatpush1.msra.mxu0 %v716
    %885 = vmatprep.subr.mxu0 %v713
    %886 = vmatpush1.msra.mxu0 %v712
    %887 = vmatprep.subr.mxu0 %v709
    %888 = vmatpush1.msra.mxu0 %v708
    %889 = vmatprep.subr.mxu0 %v705
    %890 = vmatpush1.msra.mxu0 %v704
    %891 = vmatprep.subr.mxu0 %v701
    %892 = vmatpush1.msra.mxu0 %v700
    %893 = vmatprep.subr.mxu0 %v697
    %894 = vmatpush1.msra.mxu0 %v696
    %895 = vmatprep.subr.mxu0 %v693
    %896 = vmatpush1.msra.mxu0 %v692
    %897 = vmatprep.subr.mxu0 %v689
    %898 = vmatpush1.msra.mxu0 %v688
    %899 = vmatprep.subr.mxu0 %v685
    %900 = vmatpush1.msra.mxu0 %v684
    %901 = vmatprep.subr.mxu0 %v681
    %902 = vmatpush1.msra.mxu0 %v680
    %903 = vmatprep.subr.mxu0 %v677
    %904 = vmatpush1.msra.mxu0 %v676
    %905 = vmatprep.subr.mxu0 %v801
    %906 = vmatpush2.msra.mxu0 %v800
    %907 = vmatprep.subr.mxu0 %v797
    %908 = vmatpush2.msra.mxu0 %v796
    %909 = vmatprep.subr.mxu0 %v793
    %910 = vmatpush2.msra.mxu0 %v792
    %911 = vmatprep.subr.mxu0 %v789
    %912 = vmatpush2.msra.mxu0 %v788
    %913 = vmatprep.subr.mxu0 %v785
    %914 = vmatpush2.msra.mxu0 %v784
    %915 = vmatprep.subr.mxu0 %v781
    %916 = vmatpush2.msra.mxu0 %v780
    %917 = vmatprep.subr.mxu0 %v777
    %918 = vmatpush2.msra.mxu0 %v776
    %919 = vmatprep.subr.mxu0 %v773
    %920 = vmatpush2.msra.mxu0 %v772
    %921 = vmatprep.subr.mxu0 %v769
    %922 = vmatpush2.msra.mxu0 %v768
    %923 = vmatprep.subr.mxu0 %v765
    %924 = vmatpush2.msra.mxu0 %v764
    %925 = vmatprep.subr.mxu0 %v761
    %926 = vmatpush2.msra.mxu0 %v760
    %927 = vmatprep.subr.mxu0 %v757
    %928 = vmatpush2.msra.mxu0 %v756
    %929 = vmatprep.subr.mxu0 %v753
    %930 = vmatpush2.msra.mxu0 %v752
    %931 = vmatprep.subr.mxu0 %v749
    %932 = vmatpush2.msra.mxu0 %v748
    %933 = vmatprep.subr.mxu0 %v745
    %934 = vmatpush2.msra.mxu0 %v744
    %935 = vmatprep.subr.mxu0 %v741
    %936 = vmatpush2.msra.mxu0 %v740
    %937 = vmatprep.mubr.f32.mxu0 %v673
    %938 = vmatmul.mubr.f32.gmra.mxu0 %v672
    %v939 = vpop.f32.mrf.mxu0
    %v940 = vadd.f32 0.0, %v939
    %v941 = vpop.f32.mrf.mxu0
    %v942 = vadd.f32 0.0, %v941
    %943 = vdwg.mxu0
    %v944 = vadd.f32 %v869, %v431
    %v945 = vadd.f32 %v871, %v433
    %v946 = vadd.f32 %v940, %v502
    %v947 = vadd.f32 %v942, %v504
    %v948 = vsub.f32 %v944, %v946
    %v949 = vsub.f32 %v945, %v947
    %v950 = vmul.f32 %v948, %v948
    %v951 = vmul.f32 %v949, %v949
    %v952 = vld [vmem:[#allocation7 + $0x20] sm:$0xff]
    %v953 = vld [vmem:[#allocation7 + $0x28] sm:$0xff]
    %v954 = vld [vmem:[#allocation7 + $0x68] sm:$0xff]
    %v955 = vld [vmem:[#allocation7 + $0x70] sm:$0xff]
    %v956 = vld [vmem:[#allocation7 + $0xb0] sm:$0xff]
    %v957 = vld [vmem:[#allocation7 + $0xb8] sm:$0xff]
    %v958 = vld [vmem:[#allocation7 + $0xf8] sm:$0xff]
    %v959 = vld [vmem:[#allocation7 + $0x100] sm:$0xff]
    %v960 = vld [vmem:[#allocation7 + $0x140] sm:$0xff]
    %v961 = vld [vmem:[#allocation7 + $0x148] sm:$0xff]
    %v962 = vld [vmem:[#allocation7 + $0x188] sm:$0xff]
    %v963 = vld [vmem:[#allocation7 + $0x190] sm:$0xff]
    %v964 = vld [vmem:[#allocation7 + $0x1d0] sm:$0xff]
    %v965 = vld [vmem:[#allocation7 + $0x1d8] sm:$0xff]
    %v966 = vld [vmem:[#allocation7 + $0x218] sm:$0xff]
    %v967 = vld [vmem:[#allocation7 + $0x220] sm:$0xff]
    %v968 = vld [vmem:[#allocation7 + $0x260] sm:$0xff]
    %v969 = vld [vmem:[#allocation7 + $0x268] sm:$0xff]
    %v970 = vld [vmem:[#allocation7 + $0x2a8] sm:$0xff]
    %v971 = vld [vmem:[#allocation7 + $0x2b0] sm:$0xff]
    %v972 = vld [vmem:[#allocation7 + $0x2f0] sm:$0xff]
    %v973 = vld [vmem:[#allocation7 + $0x2f8] sm:$0xff]
    %v974 = vld [vmem:[#allocation7 + $0x338] sm:$0xff]
    %v975 = vld [vmem:[#allocation7 + $0x340] sm:$0xff]
    %v976 = vld [vmem:[#allocation7 + $0x380] sm:$0xff]
    %v977 = vld [vmem:[#allocation7 + $0x388] sm:$0xff]
    %v978 = vld [vmem:[#allocation7 + $0x3c8] sm:$0xff]
    %v979 = vld [vmem:[#allocation7 + $0x3d0] sm:$0xff]
    %v980 = vld [vmem:[#allocation7 + $0x410] sm:$0xff]
    %v981 = vld [vmem:[#allocation7 + $0x418] sm:$0xff]
    %v982 = vld [vmem:[#allocation7 + $0x458] sm:$0xff]
    %v983 = vld [vmem:[#allocation7 + $0x460] sm:$0xff]
    %v984 = vld [vmem:[#allocation7 + $0x4a0] sm:$0xff]
    %v985 = vld [vmem:[#allocation7 + $0x4a8] sm:$0xff]
    %v986 = vld [vmem:[#allocation7 + $0x4e8] sm:$0xff]
    %v987 = vld [vmem:[#allocation7 + $0x4f0] sm:$0xff]
    %v988 = vld [vmem:[#allocation7 + $0x530] sm:$0xff]
    %v989 = vld [vmem:[#allocation7 + $0x538] sm:$0xff]
    %v990 = vld [vmem:[#allocation7 + $0x578] sm:$0xff]
    %v991 = vld [vmem:[#allocation7 + $0x580] sm:$0xff]
    %v992 = vld [vmem:[#allocation7 + $0x5c0] sm:$0xff]
    %v993 = vld [vmem:[#allocation7 + $0x5c8] sm:$0xff]
    %v994 = vld [vmem:[#allocation7 + $0x608] sm:$0xff]
    %v995 = vld [vmem:[#allocation7 + $0x610] sm:$0xff]
    %v996 = vld [vmem:[#allocation7 + $0x650] sm:$0xff]
    %v997 = vld [vmem:[#allocation7 + $0x658] sm:$0xff]
    %v998 = vld [vmem:[#allocation7 + $0x698] sm:$0xff]
    %v999 = vld [vmem:[#allocation7 + $0x6a0] sm:$0xff]
    %v1000 = vld [vmem:[#allocation7 + $0x6e0] sm:$0xff]
    %v1001 = vld [vmem:[#allocation7 + $0x6e8] sm:$0xff]
    %v1002 = vld [vmem:[#allocation7 + $0x728] sm:$0xff]
    %v1003 = vld [vmem:[#allocation7 + $0x730] sm:$0xff]
    %v1004 = vld [vmem:[#allocation7 + $0x770] sm:$0xff]
    %v1005 = vld [vmem:[#allocation7 + $0x778] sm:$0xff]
    %v1006 = vld [vmem:[#allocation7 + $0x7b8] sm:$0xff]
    %v1007 = vld [vmem:[#allocation7 + $0x7c0] sm:$0xff]
    %v1008 = vld [vmem:[#allocation7 + $0x800] sm:$0xff]
    %v1009 = vld [vmem:[#allocation7 + $0x808] sm:$0xff]
    %v1010 = vld [vmem:[#allocation7 + $0x848] sm:$0xff]
    %v1011 = vld [vmem:[#allocation7 + $0x850] sm:$0xff]
    %v1012 = vld [vmem:[#allocation7 + $0x890] sm:$0xff]
    %v1013 = vld [vmem:[#allocation7 + $0x898] sm:$0xff]
    %v1014 = vld [vmem:[#allocation7 + $0x8d8] sm:$0xff]
    %v1015 = vld [vmem:[#allocation7 + $0x8e0] sm:$0xff]
    %1016 = vmatprep.subr.mxu0 %v983
    %1017 = vmatpush1.msra.mxu0 %v982
    %1018 = vmatprep.subr.mxu0 %v981
    %1019 = vmatpush1.msra.mxu0 %v980
    %1020 = vmatprep.subr.mxu0 %v979
    %1021 = vmatpush1.msra.mxu0 %v978
    %1022 = vmatprep.subr.mxu0 %v977
    %1023 = vmatpush1.msra.mxu0 %v976
    %1024 = vmatprep.subr.mxu0 %v975
    %1025 = vmatpush1.msra.mxu0 %v974
    %1026 = vmatprep.subr.mxu0 %v973
    %1027 = vmatpush1.msra.mxu0 %v972
    %1028 = vmatprep.subr.mxu0 %v971
    %1029 = vmatpush1.msra.mxu0 %v970
    %1030 = vmatprep.subr.mxu0 %v969
    %1031 = vmatpush1.msra.mxu0 %v968
    %1032 = vmatprep.subr.mxu0 %v967
    %1033 = vmatpush1.msra.mxu0 %v966
    %1034 = vmatprep.subr.mxu0 %v965
    %1035 = vmatpush1.msra.mxu0 %v964
    %1036 = vmatprep.subr.mxu0 %v963
    %1037 = vmatpush1.msra.mxu0 %v962
    %1038 = vmatprep.subr.mxu0 %v961
    %1039 = vmatpush1.msra.mxu0 %v960
    %1040 = vmatprep.subr.mxu0 %v959
    %1041 = vmatpush1.msra.mxu0 %v958
    %1042 = vmatprep.subr.mxu0 %v957
    %1043 = vmatpush1.msra.mxu0 %v956
    %1044 = vmatprep.subr.mxu0 %v955
    %1045 = vmatpush1.msra.mxu0 %v954
    %1046 = vmatprep.subr.mxu0 %v953
    %1047 = vmatpush1.msra.mxu0 %v952
    %1048 = vmatprep.subr.mxu0 %v1015
    %1049 = vmatpush2.msra.mxu0 %v1014
    %1050 = vmatprep.subr.mxu0 %v1013
    %1051 = vmatpush2.msra.mxu0 %v1012
    %1052 = vmatprep.subr.mxu0 %v1011
    %1053 = vmatpush2.msra.mxu0 %v1010
    %1054 = vmatprep.subr.mxu0 %v1009
    %1055 = vmatpush2.msra.mxu0 %v1008
    %1056 = vmatprep.subr.mxu0 %v1007
    %1057 = vmatpush2.msra.mxu0 %v1006
    %1058 = vmatprep.subr.mxu0 %v1005
    %1059 = vmatpush2.msra.mxu0 %v1004
    %1060 = vmatprep.subr.mxu0 %v1003
    %1061 = vmatpush2.msra.mxu0 %v1002
    %1062 = vmatprep.subr.mxu0 %v1001
    %1063 = vmatpush2.msra.mxu0 %v1000
    %1064 = vmatprep.subr.mxu0 %v999
    %1065 = vmatpush2.msra.mxu0 %v998
    %1066 = vmatprep.subr.mxu0 %v997
    %1067 = vmatpush2.msra.mxu0 %v996
    %1068 = vmatprep.subr.mxu0 %v995
    %1069 = vmatpush2.msra.mxu0 %v994
    %1070 = vmatprep.subr.mxu0 %v993
    %1071 = vmatpush2.msra.mxu0 %v992
    %1072 = vmatprep.subr.mxu0 %v991
    %1073 = vmatpush2.msra.mxu0 %v990
    %1074 = vmatprep.subr.mxu0 %v989
    %1075 = vmatpush2.msra.mxu0 %v988
    %1076 = vmatprep.subr.mxu0 %v987
    %1077 = vmatpush2.msra.mxu0 %v986
    %1078 = vmatprep.subr.mxu0 %v985
    %1079 = vmatpush2.msra.mxu0 %v984
    %1080 = vmatprep.mubr.f32.mxu0 %v951
    %1081 = vmatmul.mubr.f32.gmra.mxu0 %v950
    %v1082 = vpop.f32.mrf.mxu0
    %v1083 = vadd.f32 1e-05, %v1082
    %v1084 = vpop.f32.mrf.mxu0
    %v1085 = vadd.f32 1e-05, %v1084
    %1086 = vdwg.mxu0
    %v1087 = vrsqrt.pop %v1083
    %v1088 = vrsqrt.pop %v1085
    %v1089 = vmul.f32 %v948, %v1087
    %v1090 = vmul.f32 %v949, %v1088
    %v1092 = vlaneseq
    %v1093 = vshrl.u32 %v1092, 7
    %v1094 = vsub.s32 0, %v1093
    %v1095 = vrot.slane %v159, %v1094
    %v1096 = vlaneseq
    %v1097 = vshrl.u32 %v1096, 7
    %v1098 = vsub.s32 1, %v1097
    %v1099 = vrot.slane %v159, %v1098
    %v1102 = vmul.f32 %v1089, %v1095
    %v1103 = vmul.f32 %v1090, %v1099
    %v1105 = vlaneseq
    %v1106 = vshrl.u32 %v1105, 7
    %v1107 = vsub.s32 0, %v1106
    %v1108 = vrot.slane %v161, %v1107
    %v1109 = vlaneseq
    %v1110 = vshrl.u32 %v1109, 7
    %v1111 = vsub.s32 1, %v1110
    %v1112 = vrot.slane %v161, %v1111
    %v1115 = vadd.f32 %v1102, %v1108
    %v1116 = vadd.f32 %v1103, %v1112
    %v1117 = vld [vmem:[#allocation7 + $0x30] sm:$0xff]
    %v1118 = vld [vmem:[#allocation7 + $0x38] sm:$0xff]
    %v1119 = vld [vmem:[#allocation7 + $0x78] sm:$0xff]
    %v1120 = vld [vmem:[#allocation7 + $0x80] sm:$0xff]
    %v1121 = vld [vmem:[#allocation7 + $0xc0] sm:$0xff]
    %v1122 = vld [vmem:[#allocation7 + $0xc8] sm:$0xff]
    %v1123 = vld [vmem:[#allocation7 + $0x108] sm:$0xff]
    %v1124 = vld [vmem:[#allocation7 + $0x110] sm:$0xff]
    %v1125 = vld [vmem:[#allocation7 + $0x150] sm:$0xff]
    %v1126 = vld [vmem:[#allocation7 + $0x158] sm:$0xff]
    %v1127 = vld [vmem:[#allocation7 + $0x198] sm:$0xff]
    %v1128 = vld [vmem:[#allocation7 + $0x1a0] sm:$0xff]
    %v1129 = vld [vmem:[#allocation7 + $0x1e0] sm:$0xff]
    %v1130 = vld [vmem:[#allocation7 + $0x1e8] sm:$0xff]
    %v1131 = vld [vmem:[#allocation7 + $0x228] sm:$0xff]
    %v1132 = vld [vmem:[#allocation7 + $0x230] sm:$0xff]
    %v1133 = vld [vmem:[#allocation7 + $0x270] sm:$0xff]
    %v1134 = vld [vmem:[#allocation7 + $0x278] sm:$0xff]
    %v1135 = vld [vmem:[#allocation7 + $0x2b8] sm:$0xff]
    %v1136 = vld [vmem:[#allocation7 + $0x2c0] sm:$0xff]
    %v1137 = vld [vmem:[#allocation7 + $0x300] sm:$0xff]
    %v1138 = vld [vmem:[#allocation7 + $0x308] sm:$0xff]
    %v1139 = vld [vmem:[#allocation7 + $0x348] sm:$0xff]
    %v1140 = vld [vmem:[#allocation7 + $0x350] sm:$0xff]
    %v1141 = vld [vmem:[#allocation7 + $0x390] sm:$0xff]
    %v1142 = vld [vmem:[#allocation7 + $0x398] sm:$0xff]
    %v1143 = vld [vmem:[#allocation7 + $0x3d8] sm:$0xff]
    %v1144 = vld [vmem:[#allocation7 + $0x3e0] sm:$0xff]
    %v1145 = vld [vmem:[#allocation7 + $0x420] sm:$0xff]
    %v1146 = vld [vmem:[#allocation7 + $0x428] sm:$0xff]
    %v1147 = vld [vmem:[#allocation7 + $0x468] sm:$0xff]
    %v1148 = vld [vmem:[#allocation7 + $0x470] sm:$0xff]
    %v1149 = vld [vmem:[#allocation7 + $0x4b0] sm:$0xff]
    %v1150 = vld [vmem:[#allocation7 + $0x4b8] sm:$0xff]
    %v1151 = vld [vmem:[#allocation7 + $0x4f8] sm:$0xff]
    %v1152 = vld [vmem:[#allocation7 + $0x500] sm:$0xff]
    %v1153 = vld [vmem:[#allocation7 + $0x540] sm:$0xff]
    %v1154 = vld [vmem:[#allocation7 + $0x548] sm:$0xff]
    %v1155 = vld [vmem:[#allocation7 + $0x588] sm:$0xff]
    %v1156 = vld [vmem:[#allocation7 + $0x590] sm:$0xff]
    %v1157 = vld [vmem:[#allocation7 + $0x5d0] sm:$0xff]
    %v1158 = vld [vmem:[#allocation7 + $0x5d8] sm:$0xff]
    %v1159 = vld [vmem:[#allocation7 + $0x618] sm:$0xff]
    %v1160 = vld [vmem:[#allocation7 + $0x620] sm:$0xff]
    %v1161 = vld [vmem:[#allocation7 + $0x660] sm:$0xff]
    %v1162 = vld [vmem:[#allocation7 + $0x668] sm:$0xff]
    %v1163 = vld [vmem:[#allocation7 + $0x6a8] sm:$0xff]
    %v1164 = vld [vmem:[#allocation7 + $0x6b0] sm:$0xff]
    %v1165 = vld [vmem:[#allocation7 + $0x6f0] sm:$0xff]
    %v1166 = vld [vmem:[#allocation7 + $0x6f8] sm:$0xff]
    %v1167 = vld [vmem:[#allocation7 + $0x738] sm:$0xff]
    %v1168 = vld [vmem:[#allocation7 + $0x740] sm:$0xff]
    %v1169 = vld [vmem:[#allocation7 + $0x780] sm:$0xff]
    %v1170 = vld [vmem:[#allocation7 + $0x788] sm:$0xff]
    %v1171 = vld [vmem:[#allocation7 + $0x7c8] sm:$0xff]
    %v1172 = vld [vmem:[#allocation7 + $0x7d0] sm:$0xff]
    %v1173 = vld [vmem:[#allocation7 + $0x810] sm:$0xff]
    %v1174 = vld [vmem:[#allocation7 + $0x818] sm:$0xff]
    %v1175 = vld [vmem:[#allocation7 + $0x858] sm:$0xff]
    %v1176 = vld [vmem:[#allocation7 + $0x860] sm:$0xff]
    %v1177 = vld [vmem:[#allocation7 + $0x8a0] sm:$0xff]
    %v1178 = vld [vmem:[#allocation7 + $0x8a8] sm:$0xff]
    %v1179 = vld [vmem:[#allocation7 + $0x8e8] sm:$0xff]
    %v1180 = vld [vmem:[#allocation7 + $0x8f0] sm:$0xff]
    %1181 = vmatprep.subr.mxu0 %v1148
    %1182 = vmatpush1.msra.mxu0 %v1147
    %1183 = vmatprep.subr.mxu0 %v1146
    %1184 = vmatpush1.msra.mxu0 %v1145
    %1185 = vmatprep.subr.mxu0 %v1144
    %1186 = vmatpush1.msra.mxu0 %v1143
    %1187 = vmatprep.subr.mxu0 %v1142
    %1188 = vmatpush1.msra.mxu0 %v1141
    %1189 = vmatprep.subr.mxu0 %v1140
    %1190 = vmatpush1.msra.mxu0 %v1139
    %1191 = vmatprep.subr.mxu0 %v1138
    %1192 = vmatpush1.msra.mxu0 %v1137
    %1193 = vmatprep.subr.mxu0 %v1136
    %1194 = vmatpush1.msra.mxu0 %v1135
    %1195 = vmatprep.subr.mxu0 %v1134
    %1196 = vmatpush1.msra.mxu0 %v1133
    %1197 = vmatprep.subr.mxu0 %v1132
    %1198 = vmatpush1.msra.mxu0 %v1131
    %1199 = vmatprep.subr.mxu0 %v1130
    %1200 = vmatpush1.msra.mxu0 %v1129
    %1201 = vmatprep.subr.mxu0 %v1128
    %1202 = vmatpush1.msra.mxu0 %v1127
    %1203 = vmatprep.subr.mxu0 %v1126
    %1204 = vmatpush1.msra.mxu0 %v1125
    %1205 = vmatprep.subr.mxu0 %v1124
    %1206 = vmatpush1.msra.mxu0 %v1123
    %1207 = vmatprep.subr.mxu0 %v1122
    %1208 = vmatpush1.msra.mxu0 %v1121
    %1209 = vmatprep.subr.mxu0 %v1120
    %1210 = vmatpush1.msra.mxu0 %v1119
    %1211 = vmatprep.subr.mxu0 %v1118
    %1212 = vmatpush1.msra.mxu0 %v1117
    %1213 = vmatprep.subr.mxu0 %v1180
    %1214 = vmatpush2.msra.mxu0 %v1179
    %1215 = vmatprep.subr.mxu0 %v1178
    %1216 = vmatpush2.msra.mxu0 %v1177
    %1217 = vmatprep.subr.mxu0 %v1176
    %1218 = vmatpush2.msra.mxu0 %v1175
    %1219 = vmatprep.subr.mxu0 %v1174
    %1220 = vmatpush2.msra.mxu0 %v1173
    %1221 = vmatprep.subr.mxu0 %v1172
    %1222 = vmatpush2.msra.mxu0 %v1171
    %1223 = vmatprep.subr.mxu0 %v1170
    %1224 = vmatpush2.msra.mxu0 %v1169
    %1225 = vmatprep.subr.mxu0 %v1168
    %1226 = vmatpush2.msra.mxu0 %v1167
    %1227 = vmatprep.subr.mxu0 %v1166
    %1228 = vmatpush2.msra.mxu0 %v1165
    %1229 = vmatprep.subr.mxu0 %v1164
    %1230 = vmatpush2.msra.mxu0 %v1163
    %1231 = vmatprep.subr.mxu0 %v1162
    %1232 = vmatpush2.msra.mxu0 %v1161
    %1233 = vmatprep.subr.mxu0 %v1160
    %1234 = vmatpush2.msra.mxu0 %v1159
    %1235 = vmatprep.subr.mxu0 %v1158
    %1236 = vmatpush2.msra.mxu0 %v1157
    %1237 = vmatprep.subr.mxu0 %v1156
    %1238 = vmatpush2.msra.mxu0 %v1155
    %1239 = vmatprep.subr.mxu0 %v1154
    %1240 = vmatpush2.msra.mxu0 %v1153
    %1241 = vmatprep.subr.mxu0 %v1152
    %1242 = vmatpush2.msra.mxu0 %v1151
    %1243 = vmatprep.subr.mxu0 %v1150
    %1244 = vmatpush2.msra.mxu0 %v1149
    %1245 = vmatprep.mubr.f32.mxu0 %v1116
    %1246 = vmatmul.mubr.f32.gmra.mxu0 %v1115
    %v1247 = vpop.f32.mrf.mxu0
    %v1248 = vadd.f32 0.0, %v1247
    %v1249 = vpop.f32.mrf.mxu0
    %v1250 = vadd.f32 0.0, %v1249
    %1251 = vdwg.mxu0
    %v1252 = vadd.f32 %v1248, %v573
    %v1253 = vadd.f32 %v1250, %v575
    %v1254 = vsub.f32 %v1252, %v1253
    %v1255 = vmul.f32 %v1254, %v1254
    %v1256 = vld [vmem:[#allocation8 + $0x18] sm:$0xff]
    %v1257 = vld [vmem:[#allocation8 + $0x38] sm:$0xff]
    %v1258 = vld [vmem:[#allocation8 + $0x58] sm:$0xff]
    %v1259 = vld [vmem:[#allocation8 + $0x78] sm:$0xff]
    %v1260 = vld [vmem:[#allocation8 + $0x98] sm:$0xff]
    %v1261 = vld [vmem:[#allocation8 + $0xb8] sm:$0xff]
    %v1262 = vld [vmem:[#allocation8 + $0xd8] sm:$0xff]
    %v1263 = vld [vmem:[#allocation8 + $0xf8] sm:$0xff]
    %v1265 = vsel %vm218, %v1255, 0
    %1267 = vmatprep.subr.mxu0 0.0
    %1268 = vmatpush1.msra.mxu0 0.0
    %1269 = vmatprep.subr.mxu0 0.0
    %1270 = vmatpush1.msra.mxu0 0.0
    %1271 = vmatprep.subr.mxu0 0.0
    %1272 = vmatpush1.msra.mxu0 0.0
    %1273 = vmatprep.subr.mxu0 0.0
    %1274 = vmatpush1.msra.mxu0 0.0
    %1275 = vmatprep.subr.mxu0 0.0
    %1276 = vmatpush1.msra.mxu0 0.0
    %1277 = vmatprep.subr.mxu0 0.0
    %1278 = vmatpush1.msra.mxu0 0.0
    %1279 = vmatprep.subr.mxu0 0.0
    %1280 = vmatpush1.msra.mxu0 0.0
    %1281 = vmatprep.subr.mxu0 0.0
    %1282 = vmatpush1.msra.mxu0 0.0
    %1283 = vmatprep.subr.mxu0 0.0
    %1284 = vmatpush1.msra.mxu0 %v1263
    %1285 = vmatprep.subr.mxu0 0.0
    %1286 = vmatpush1.msra.mxu0 %v1262
    %1287 = vmatprep.subr.mxu0 0.0
    %1288 = vmatpush1.msra.mxu0 %v1261
    %1289 = vmatprep.subr.mxu0 0.0
    %1290 = vmatpush1.msra.mxu0 %v1260
    %1291 = vmatprep.subr.mxu0 0.0
    %1292 = vmatpush1.msra.mxu0 %v1259
    %1293 = vmatprep.subr.mxu0 0.0
    %1294 = vmatpush1.msra.mxu0 %v1258
    %1295 = vmatprep.subr.mxu0 0.0
    %1296 = vmatpush1.msra.mxu0 %v1257
    %1297 = vmatprep.subr.mxu0 0.0
    %1298 = vmatpush1.msra.mxu0 %v1256
    %1299 = vmatprep.subr.mxu0 0.0
    %1300 = vmatpush2.msra.mxu0 0.0
    %1301 = vmatprep.subr.mxu0 0.0
    %1302 = vmatpush2.msra.mxu0 0.0
    %1303 = vmatprep.subr.mxu0 0.0
    %1304 = vmatpush2.msra.mxu0 0.0
    %1305 = vmatprep.subr.mxu0 0.0
    %1306 = vmatpush2.msra.mxu0 0.0
    %1307 = vmatprep.subr.mxu0 0.0
    %1308 = vmatpush2.msra.mxu0 0.0
    %1309 = vmatprep.subr.mxu0 0.0
    %1310 = vmatpush2.msra.mxu0 0.0
    %1311 = vmatprep.subr.mxu0 0.0
    %1312 = vmatpush2.msra.mxu0 0.0
    %1313 = vmatprep.subr.mxu0 0.0
    %1314 = vmatpush2.msra.mxu0 0.0
    %1315 = vmatprep.subr.mxu0 0.0
    %1316 = vmatpush2.msra.mxu0 0.0
    %1317 = vmatprep.subr.mxu0 0.0
    %1318 = vmatpush2.msra.mxu0 0.0
    %1319 = vmatprep.subr.mxu0 0.0
    %1320 = vmatpush2.msra.mxu0 0.0
    %1321 = vmatprep.subr.mxu0 0.0
    %1322 = vmatpush2.msra.mxu0 0.0
    %1323 = vmatprep.subr.mxu0 0.0
    %1324 = vmatpush2.msra.mxu0 0.0
    %1325 = vmatprep.subr.mxu0 0.0
    %1326 = vmatpush2.msra.mxu0 0.0
    %1327 = vmatprep.subr.mxu0 0.0
    %1328 = vmatpush2.msra.mxu0 0.0
    %1329 = vmatprep.subr.mxu0 0.0
    %1330 = vmatpush2.msra.mxu0 0.0
    %1331 = vmatprep.mubr.f32.mxu0 0.0
    %1332 = vmatmul.mubr.f32.gmra.mxu0 %v1265
    %v1333 = vpop.f32.mrf.mxu0
    %v1334 = vadd.f32 1e-05, %v1333
    %v1335 = vpop.f32.mrf.mxu0
    %1336 = vdwg.mxu0
    %v1337 = vrsqrt.pop %v1334
    %v1338 = vmul.f32 %v1254, %v1337
    %v1339 = vmul.f32 %v1338, %v162
    %v1340 = vadd.f32 %v1252, %v1339
    %v1341 = vadd.f32 %v1340, %v163
    %v1342 = vld [vmem:[#allocation8] sm:$0xff]
    %v1343 = vld [vmem:[#allocation8 + $0x8] sm:$0xff]
    %v1344 = vld [vmem:[#allocation8 + $0x10] sm:$0xff]
    %v1345 = vld [vmem:[#allocation8 + $0x20] sm:$0xff]
    %v1346 = vld [vmem:[#allocation8 + $0x28] sm:$0xff]
    %v1347 = vld [vmem:[#allocation8 + $0x30] sm:$0xff]
    %v1348 = vld [vmem:[#allocation8 + $0x40] sm:$0xff]
    %v1349 = vld [vmem:[#allocation8 + $0x48] sm:$0xff]
    %v1350 = vld [vmem:[#allocation8 + $0x50] sm:$0xff]
    %v1351 = vld [vmem:[#allocation8 + $0x60] sm:$0xff]
    %v1352 = vld [vmem:[#allocation8 + $0x68] sm:$0xff]
    %v1353 = vld [vmem:[#allocation8 + $0x70] sm:$0xff]
    %v1354 = vld [vmem:[#allocation8 + $0x80] sm:$0xff]
    %v1355 = vld [vmem:[#allocation8 + $0x88] sm:$0xff]
    %v1356 = vld [vmem:[#allocation8 + $0x90] sm:$0xff]
    %v1357 = vld [vmem:[#allocation8 + $0xa0] sm:$0xff]
    %v1358 = vld [vmem:[#allocation8 + $0xa8] sm:$0xff]
    %v1359 = vld [vmem:[#allocation8 + $0xb0] sm:$0xff]
    %v1360 = vld [vmem:[#allocation8 + $0xc0] sm:$0xff]
    %v1361 = vld [vmem:[#allocation8 + $0xc8] sm:$0xff]
    %v1362 = vld [vmem:[#allocation8 + $0xd0] sm:$0xff]
    %v1363 = vld [vmem:[#allocation8 + $0xe0] sm:$0xff]
    %v1364 = vld [vmem:[#allocation8 + $0xe8] sm:$0xff]
    %v1365 = vld [vmem:[#allocation8 + $0xf0] sm:$0xff]
    %v1367 = vlaneseq
    %v1368 = vshrl.u32 %v1367, 7
    %v1369 = vsub.s32 0, %v1368
    %v1370 = vrot.slane %v165, %v1369
    %v1371 = vlaneseq
    %v1372 = vshrl.u32 %v1371, 7
    %v1373 = vsub.s32 1, %v1372
    %v1374 = vrot.slane %v165, %v1373
    %v1375 = vlaneseq
    %v1376 = vshrl.u32 %v1375, 7
    %v1377 = vsub.s32 2, %v1376
    %v1378 = vrot.slane %v165, %v1377
    %v1383 = vsel %vm218, %v1341, 0
    %1385 = vmatprep.subr.mxu0 0.0
    %1386 = vmatpush1.msra.mxu0 0.0
    %1387 = vmatprep.subr.mxu0 0.0
    %1388 = vmatpush1.msra.mxu0 0.0
    %1389 = vmatprep.subr.mxu0 0.0
    %1390 = vmatpush1.msra.mxu0 0.0
    %1391 = vmatprep.subr.mxu0 0.0
    %1392 = vmatpush1.msra.mxu0 0.0
    %1393 = vmatprep.subr.mxu0 0.0
    %1394 = vmatpush1.msra.mxu0 0.0
    %1395 = vmatprep.subr.mxu0 0.0
    %1396 = vmatpush1.msra.mxu0 0.0
    %1397 = vmatprep.subr.mxu0 0.0
    %1398 = vmatpush1.msra.mxu0 0.0
    %1399 = vmatprep.subr.mxu0 0.0
    %1400 = vmatpush1.msra.mxu0 0.0
    %1401 = vmatprep.subr.mxu0 %v1364
    %1402 = vmatpush1.msra.mxu0 %v1363
    %1403 = vmatprep.subr.mxu0 %v1361
    %1404 = vmatpush1.msra.mxu0 %v1360
    %1405 = vmatprep.subr.mxu0 %v1358
    %1406 = vmatpush1.msra.mxu0 %v1357
    %1407 = vmatprep.subr.mxu0 %v1355
    %1408 = vmatpush1.msra.mxu0 %v1354
    %1409 = vmatprep.subr.mxu0 %v1352
    %1410 = vmatpush1.msra.mxu0 %v1351
    %1411 = vmatprep.subr.mxu0 %v1349
    %1412 = vmatpush1.msra.mxu0 %v1348
    %1413 = vmatprep.subr.mxu0 %v1346
    %1414 = vmatpush1.msra.mxu0 %v1345
    %1415 = vmatprep.subr.mxu0 %v1343
    %1416 = vmatpush1.msra.mxu0 %v1342
    %1417 = vmatprep.subr.mxu0 0.0
    %1418 = vmatpush2.msra.mxu0 0.0
    %1419 = vmatprep.subr.mxu0 0.0
    %1420 = vmatpush2.msra.mxu0 0.0
    %1421 = vmatprep.subr.mxu0 0.0
    %1422 = vmatpush2.msra.mxu0 0.0
    %1423 = vmatprep.subr.mxu0 0.0
    %1424 = vmatpush2.msra.mxu0 0.0
    %1425 = vmatprep.subr.mxu0 0.0
    %1426 = vmatpush2.msra.mxu0 0.0
    %1427 = vmatprep.subr.mxu0 0.0
    %1428 = vmatpush2.msra.mxu0 0.0
    %1429 = vmatprep.subr.mxu0 0.0
    %1430 = vmatpush2.msra.mxu0 0.0
    %1431 = vmatprep.subr.mxu0 0.0
    %1432 = vmatpush2.msra.mxu0 0.0
    %1433 = vmatprep.subr.mxu0 0.0
    %1434 = vmatpush2.msra.mxu0 0.0
    %1435 = vmatprep.subr.mxu0 0.0
    %1436 = vmatpush2.msra.mxu0 0.0
    %1437 = vmatprep.subr.mxu0 0.0
    %1438 = vmatpush2.msra.mxu0 0.0
    %1439 = vmatprep.subr.mxu0 0.0
    %1440 = vmatpush2.msra.mxu0 0.0
    %1441 = vmatprep.subr.mxu0 0.0
    %1442 = vmatpush2.msra.mxu0 0.0
    %1443 = vmatprep.subr.mxu0 0.0
    %1444 = vmatpush2.msra.mxu0 0.0
    %1445 = vmatprep.subr.mxu0 0.0
    %1446 = vmatpush2.msra.mxu0 0.0
    %1447 = vmatprep.subr.mxu0 0.0
    %1448 = vmatpush2.msra.mxu0 0.0
    %1449 = vmatprep.mubr.f32.mxu0 0.0
    %1450 = vmatmul.mubr.f32.gmra.mxu0 %v1383
    %v1451 = vpop.f32.mrf.mxu0
    %v1452 = vadd.f32 %v1370, %v1451
    %v1453 = vpop.f32.mrf.mxu0
    %v1454 = vadd.f32 %v1374, %v1453
    %1455 = vdwg.mxu0
    %1456 = vmatprep.subr.mxu0 0.0
    %1457 = vmatpush1.msra.mxu0 0.0
    %1458 = vmatprep.subr.mxu0 0.0
    %1459 = vmatpush1.msra.mxu0 0.0
    %1460 = vmatprep.subr.mxu0 0.0
    %1461 = vmatpush1.msra.mxu0 0.0
    %1462 = vmatprep.subr.mxu0 0.0
    %1463 = vmatpush1.msra.mxu0 0.0
    %1464 = vmatprep.subr.mxu0 0.0
    %1465 = vmatpush1.msra.mxu0 0.0
    %1466 = vmatprep.subr.mxu0 0.0
    %1467 = vmatpush1.msra.mxu0 0.0
    %1468 = vmatprep.subr.mxu0 0.0
    %1469 = vmatpush1.msra.mxu0 0.0
    %1470 = vmatprep.subr.mxu0 0.0
    %1471 = vmatpush1.msra.mxu0 0.0
    %1472 = vmatprep.subr.mxu0 0.0
    %1473 = vmatpush1.msra.mxu0 %v1365
    %1474 = vmatprep.subr.mxu0 0.0
    %1475 = vmatpush1.msra.mxu0 %v1362
    %1476 = vmatprep.subr.mxu0 0.0
    %1477 = vmatpush1.msra.mxu0 %v1359
    %1478 = vmatprep.subr.mxu0 0.0
    %1479 = vmatpush1.msra.mxu0 %v1356
    %1480 = vmatprep.subr.mxu0 0.0
    %1481 = vmatpush1.msra.mxu0 %v1353
    %1482 = vmatprep.subr.mxu0 0.0
    %1483 = vmatpush1.msra.mxu0 %v1350
    %1484 = vmatprep.subr.mxu0 0.0
    %1485 = vmatpush1.msra.mxu0 %v1347
    %1486 = vmatprep.subr.mxu0 0.0
    %1487 = vmatpush1.msra.mxu0 %v1344
    %1488 = vmatprep.subr.mxu0 0.0
    %1489 = vmatpush2.msra.mxu0 0.0
    %1490 = vmatprep.subr.mxu0 0.0
    %1491 = vmatpush2.msra.mxu0 0.0
    %1492 = vmatprep.subr.mxu0 0.0
    %1493 = vmatpush2.msra.mxu0 0.0
    %1494 = vmatprep.subr.mxu0 0.0
    %1495 = vmatpush2.msra.mxu0 0.0
    %1496 = vmatprep.subr.mxu0 0.0
    %1497 = vmatpush2.msra.mxu0 0.0
    %1498 = vmatprep.subr.mxu0 0.0
    %1499 = vmatpush2.msra.mxu0 0.0
    %1500 = vmatprep.subr.mxu0 0.0
    %1501 = vmatpush2.msra.mxu0 0.0
    %1502 = vmatprep.subr.mxu0 0.0
    %1503 = vmatpush2.msra.mxu0 0.0
    %1504 = vmatprep.subr.mxu0 0.0
    %1505 = vmatpush2.msra.mxu0 0.0
    %1506 = vmatprep.subr.mxu0 0.0
    %1507 = vmatpush2.msra.mxu0 0.0
    %1508 = vmatprep.subr.mxu0 0.0
    %1509 = vmatpush2.msra.mxu0 0.0
    %1510 = vmatprep.subr.mxu0 0.0
    %1511 = vmatpush2.msra.mxu0 0.0
    %1512 = vmatprep.subr.mxu0 0.0
    %1513 = vmatpush2.msra.mxu0 0.0
    %1514 = vmatprep.subr.mxu0 0.0
    %1515 = vmatpush2.msra.mxu0 0.0
    %1516 = vmatprep.subr.mxu0 0.0
    %1517 = vmatpush2.msra.mxu0 0.0
    %1518 = vmatprep.subr.mxu0 0.0
    %1519 = vmatpush2.msra.mxu0 0.0
    %1520 = vmatprep.mubr.f32.mxu0 0.0
    %1521 = vmatmul.mubr.f32.gmra.mxu0 %v1383
    %v1522 = vpop.f32.mrf.mxu0
    %v1523 = vadd.f32 %v1378, %v1522
    %v1524 = vpop.f32.mrf.mxu0
    %1525 = vdwg.mxu0
    %v1526 = vmul.f32 %v1452, 0.5
    %v1527 = vmul.f32 %v1454, 0.5
    %v1528 = vmul.f32 %v1452, 0.70710677
    %v1529 = vmul.f32 %v1454, 0.70710677
    %vm1530 = vcmp.ge.f32.partialorder %v1528, 0.0
    %vm1531 = vcmp.ge.f32.partialorder %v1529, 0.0
    %v1532 = vsel %vm1530, 1.0, -1.0
    %v1533 = vsel %vm1531, 1.0, -1.0
    %v1534 = vand.u32 2147483647, %v1528
    %v1535 = vand.u32 2147483647, %v1529
    %v1536 = vmul.f32 %v1534, 0.3275911
    %v1537 = vmul.f32 %v1535, 0.3275911
    %v1538 = vadd.f32 %v1536, 1.0
    %v1539 = vadd.f32 %v1537, 1.0
    %v1540 = vrcp.pop %v1538
    %v1541 = vmul.f32 1.0, %v1540
    %v1542 = vrcp.pop %v1539
    %v1543 = vmul.f32 1.0, %v1542
    %v1544 = vmul.f32 %v1541, 1.0614054
    %v1545 = vmul.f32 %v1543, 1.0614054
    %v1546 = vadd.f32 %v1544, -1.4531521
    %v1547 = vadd.f32 %v1545, -1.4531521
    %v1548 = vmul.f32 %v1546, %v1541
    %v1549 = vmul.f32 %v1547, %v1543
    %v1550 = vadd.f32 %v1548, 1.4214138
    %v1551 = vadd.f32 %v1549, 1.4214138
    %v1552 = vmul.f32 %v1550, %v1541
    %v1553 = vmul.f32 %v1551, %v1543
    %v1554 = vadd.f32 %v1552, -0.28449672
    %v1555 = vadd.f32 %v1553, -0.28449672
    %v1556 = vmul.f32 %v1554, %v1541
    %v1557 = vmul.f32 %v1555, %v1543
    %v1558 = vadd.f32 %v1556, 0.2548296
    %v1559 = vadd.f32 %v1557, 0.2548296
    %v1560 = vmul.f32 %v1558, %v1541
    %v1561 = vmul.f32 %v1559, %v1543
    %v1562 = vsub.f32 0.0, %v1534
    %v1563 = vsub.f32 0.0, %v1535
    %v1564 = vmul.f32 %v1562, %v1534
    %v1565 = vmul.f32 %v1563, %v1535
    %v1566 = vmul.f32 %v1564, 1.442695
    %v1567 = vpow.pop %v1566
    %v1568 = vmul.f32 %v1565, 1.442695
    %v1569 = vpow.pop %v1568
    %v1570 = vmul.f32 %v1560, %v1567
    %v1571 = vmul.f32 %v1561, %v1569
    %v1572 = vsub.f32 1.0, %v1570
    %v1573 = vsub.f32 1.0, %v1571
    %v1574 = vmul.f32 %v1532, %v1572
    %v1575 = vmul.f32 %v1533, %v1573
    %v1576 = vadd.f32 %v1574, 1.0
    %v1577 = vadd.f32 %v1575, 1.0
    %v1578 = vmul.f32 %v1526, %v1576
    %v1579 = vmul.f32 %v1527, %v1577
    %v1580 = vld [vmem:[#allocation7 + $0x40] sm:$0xff]
    %v1581 = vld [vmem:[#allocation7 + $0x88] sm:$0xff]
    %v1582 = vld [vmem:[#allocation7 + $0xd0] sm:$0xff]
    %v1583 = vld [vmem:[#allocation7 + $0x118] sm:$0xff]
    %v1584 = vld [vmem:[#allocation7 + $0x160] sm:$0xff]
    %v1585 = vld [vmem:[#allocation7 + $0x1a8] sm:$0xff]
    %v1586 = vld [vmem:[#allocation7 + $0x1f0] sm:$0xff]
    %v1587 = vld [vmem:[#allocation7 + $0x238] sm:$0xff]
    %v1588 = vld [vmem:[#allocation7 + $0x280] sm:$0xff]
    %v1589 = vld [vmem:[#allocation7 + $0x2c8] sm:$0xff]
    %v1590 = vld [vmem:[#allocation7 + $0x310] sm:$0xff]
    %v1591 = vld [vmem:[#allocation7 + $0x358] sm:$0xff]
    %v1592 = vld [vmem:[#allocation7 + $0x3a0] sm:$0xff]
    %v1593 = vld [vmem:[#allocation7 + $0x3e8] sm:$0xff]
    %v1594 = vld [vmem:[#allocation7 + $0x430] sm:$0xff]
    %v1595 = vld [vmem:[#allocation7 + $0x478] sm:$0xff]
    %v1596 = vld [vmem:[#allocation7 + $0x4c0] sm:$0xff]
    %v1597 = vld [vmem:[#allocation7 + $0x508] sm:$0xff]
    %v1598 = vld [vmem:[#allocation7 + $0x550] sm:$0xff]
    %v1599 = vld [vmem:[#allocation7 + $0x598] sm:$0xff]
    %v1600 = vld [vmem:[#allocation7 + $0x5e0] sm:$0xff]
    %v1601 = vld [vmem:[#allocation7 + $0x628] sm:$0xff]
    %v1602 = vld [vmem:[#allocation7 + $0x670] sm:$0xff]
    %v1603 = vld [vmem:[#allocation7 + $0x6b8] sm:$0xff]
    %v1604 = vld [vmem:[#allocation7 + $0x700] sm:$0xff]
    %v1605 = vld [vmem:[#allocation7 + $0x748] sm:$0xff]
    %v1606 = vld [vmem:[#allocation7 + $0x790] sm:$0xff]
    %v1607 = vld [vmem:[#allocation7 + $0x7d8] sm:$0xff]
    %v1608 = vld [vmem:[#allocation7 + $0x820] sm:$0xff]
    %v1609 = vld [vmem:[#allocation7 + $0x868] sm:$0xff]
    %v1610 = vld [vmem:[#allocation7 + $0x8b0] sm:$0xff]
    %v1611 = vld [vmem:[#allocation7 + $0x8f8] sm:$0xff]
    %1612 = vmatprep.subr.mxu0 0.0
    %1613 = vmatpush1.msra.mxu0 %v1595
    %1614 = vmatprep.subr.mxu0 0.0
    %1615 = vmatpush1.msra.mxu0 %v1594
    %1616 = vmatprep.subr.mxu0 0.0
    %1617 = vmatpush1.msra.mxu0 %v1593
    %1618 = vmatprep.subr.mxu0 0.0
    %1619 = vmatpush1.msra.mxu0 %v1592
    %1620 = vmatprep.subr.mxu0 0.0
    %1621 = vmatpush1.msra.mxu0 %v1591
    %1622 = vmatprep.subr.mxu0 0.0
    %1623 = vmatpush1.msra.mxu0 %v1590
    %1624 = vmatprep.subr.mxu0 0.0
    %1625 = vmatpush1.msra.mxu0 %v1589
    %1626 = vmatprep.subr.mxu0 0.0
    %1627 = vmatpush1.msra.mxu0 %v1588
    %1628 = vmatprep.subr.mxu0 0.0
    %1629 = vmatpush1.msra.mxu0 %v1587
    %1630 = vmatprep.subr.mxu0 0.0
    %1631 = vmatpush1.msra.mxu0 %v1586
    %1632 = vmatprep.subr.mxu0 0.0
    %1633 = vmatpush1.msra.mxu0 %v1585
    %1634 = vmatprep.subr.mxu0 0.0
    %1635 = vmatpush1.msra.mxu0 %v1584
    %1636 = vmatprep.subr.mxu0 0.0
    %1637 = vmatpush1.msra.mxu0 %v1583
    %1638 = vmatprep.subr.mxu0 0.0
    %1639 = vmatpush1.msra.mxu0 %v1582
    %1640 = vmatprep.subr.mxu0 0.0
    %1641 = vmatpush1.msra.mxu0 %v1581
    %1642 = vmatprep.subr.mxu0 0.0
    %1643 = vmatpush1.msra.mxu0 %v1580
    %1644 = vmatprep.subr.mxu0 0.0
    %1645 = vmatpush2.msra.mxu0 %v1611
    %1646 = vmatprep.subr.mxu0 0.0
    %1647 = vmatpush2.msra.mxu0 %v1610
    %1648 = vmatprep.subr.mxu0 0.0
    %1649 = vmatpush2.msra.mxu0 %v1609
    %1650 = vmatprep.subr.mxu0 0.0
    %1651 = vmatpush2.msra.mxu0 %v1608
    %1652 = vmatprep.subr.mxu0 0.0
    %1653 = vmatpush2.msra.mxu0 %v1607
    %1654 = vmatprep.subr.mxu0 0.0
    %1655 = vmatpush2.msra.mxu0 %v1606
    %1656 = vmatprep.subr.mxu0 0.0
    %1657 = vmatpush2.msra.mxu0 %v1605
    %1658 = vmatprep.subr.mxu0 0.0
    %1659 = vmatpush2.msra.mxu0 %v1604
    %1660 = vmatprep.subr.mxu0 0.0
    %1661 = vmatpush2.msra.mxu0 %v1603
    %1662 = vmatprep.subr.mxu0 0.0
    %1663 = vmatpush2.msra.mxu0 %v1602
    %1664 = vmatprep.subr.mxu0 0.0
    %1665 = vmatpush2.msra.mxu0 %v1601
    %1666 = vmatprep.subr.mxu0 0.0
    %1667 = vmatpush2.msra.mxu0 %v1600
    %1668 = vmatprep.subr.mxu0 0.0
    %1669 = vmatpush2.msra.mxu0 %v1599
    %1670 = vmatprep.subr.mxu0 0.0
    %1671 = vmatpush2.msra.mxu0 %v1598
    %1672 = vmatprep.subr.mxu0 0.0
    %1673 = vmatpush2.msra.mxu0 %v1597
    %1674 = vmatprep.subr.mxu0 0.0
    %1675 = vmatpush2.msra.mxu0 %v1596
    %1676 = vmatprep.mubr.f32.mxu0 %v1579
    %1677 = vmatmul.mubr.f32.gmra.mxu0 %v1578
    %v1678 = vpop.f32.mrf.mxu0
    %v1679 = vadd.f32 0.0, %v1678
    %v1680 = vpop.f32.mrf.mxu0
    %1681 = vdwg.mxu0
    %v1682 = vadd.f32 %v1523, %v1679
    %1683 = vst.msk [vmem:[#allocation10] sm:$0xff] %vm218, %v1682
    // Predicated region
    $region34: #{tpu_custom_call.1} parent=1 // pred_check
      _
    $region35: #{tpu_custom_call.1} parent=1 // pred_check_branch
      %1685 = sbr.rel (0) target = $region37
    $region36: #{tpu_custom_call.1} parent=1 // pred_region
      %s1687 = ssub.s32 128, 128
      %1688 = vsyncadd [#allocation4], %s1687
      %s1690 = sshll.u32 [#allocation10], 4
      %s1691 = int_to_ptr.vmem [resolvable:$true] %s1690
      %1693 = dma.vmem_to_hbm [thread:$0]  %s1691, 128, %s4, [#allocation4]
    $region37: #{tpu_custom_call.1} parent=1 // pred_fallthru
      _
    // Predicated region
    $region38: #{tpu_custom_call.1} parent=1 // pred_check
      _
    $region39: #{tpu_custom_call.1} parent=1 // pred_check_branch
      %1695 = sbr.rel (0) target = $region41
    $region40: #{tpu_custom_call.1} parent=1 // pred_region
      %1696 = dma.done [#allocation4], 128
    $region41: #{tpu_custom_call.1} parent=1 // pred_fallthru
      _
    %1697 = vsyncpa [#allocation3], 1
    %1698 = vsyncpa [#allocation6], 1
    %1699 = vsyncpa [#allocation9], 1
    %1700 = vsyncpa [#allocation4], 1

</llo_original>
